<compile_context>
chip_gen: v6e
topology: v6e:2x2x1
jax: 0.10.0
libtpu: 0.0.40
codegen_flags: <defaults>
</compile_context>

<pallas_src>
import functools

import jax
import jax.numpy as jnp
from jax import lax
from jax.experimental import pallas as pl
from jax.experimental.pallas import tpu as pltpu


def _round_up(x, m):
    return (x + m - 1) // m * m


# ----------------------------- Pallas kernel -------------------------------- #
def _make_glu_conv_kernel(taps, wq, sh, sw, n_pad, c_out, tl):
    """All arguments are static Python ints / tuples; returns the kernel body."""

    def kernel(x0_ref, xh_ref, w_ref, b_ref, o_ref):
        # x0_ref : (P, C_in, TL)      main spatial tile of the phase-split input
        # xh_ref : (P, C_in, HALO)    right halo block of the SAME array
        # w_ref  : (T, 2*Np, C_in)    fused per-tap conv1/conv2 weights (bf16)
        # b_ref  : (2*Np, 1)          fused biases (f32)
        # o_ref  : (C_out, TL)        GLU output tile (f32)
        n_phase = x0_ref.shape[0]
        # Stitch tile + halo once per stride phase: (C_in, TL + HALO).
        xc = [jnp.concatenate([x0_ref[p], xh_ref[p]], axis=-1)
              for p in range(n_phase)]
        # Bias folded into the accumulator init (no per-tap VPU add).
        acc = jnp.broadcast_to(b_ref[...], (2 * n_pad, tl)).astype(jnp.float32)
        for t, (ki, kj) in enumerate(taps):
            p = (ki % sh) * sw + (kj % sw)          # stride phase (static)
            d = (ki // sh) * wq + (kj // sw)        # static lane offset, <= HALO
            win = xc[p][:, d:d + tl]                # (C_in, TL) static slice
            acc = acc + jnp.dot(w_ref[t], win,
                                preferred_element_type=jnp.float32)
        val = acc[:c_out, :]                         # conv1 rows
        gin = acc[n_pad:n_pad + c_out, :]            # conv2 rows (8-aligned start)
        gate = 1.0 / (1.0 + jnp.exp(-gin))           # exact sigmoid, f32
        o_ref[...] = (val * gate).astype(o_ref.dtype)

    return kernel


def _pick_spatial_tile(lw, batch, halo, n_phase, c_in, c_out, n_pad, itemsize,
                       vmem_budget_bytes=6 << 20, max_tl=4096):
    """Largest lane tile (multiple of `halo`, halo itself a multiple of 128)
    whose TL-proportional VMEM footprint fits the budget; keeps >=2 grid
    blocks when B == 1 so both v7x TensorCores get work."""
    per_lane = (2 * itemsize * n_phase * c_in      # x0 block, double-buffered
                + 2 * itemsize * n_phase * c_in    # in-kernel stitched copies
                + 2 * 4 * c_out                    # output block, double-buffered
                + 4 * 2 * n_pad)                   # f32 accumulator
    tl = vmem_budget_bytes // per_lane
    tl = min(tl, max_tl, _round_up(lw, halo))
    if batch == 1 and lw > halo:
        tl = min(tl, _round_up(pl.cdiv(lw, 2), halo))
    return max(halo, (tl // halo) * halo)


def _glu_conv2d_pallas(xf, w_cat, b_cat, *, n_pad, c_out, wq, lw, sh, sw,
                       kh, kw, tl, halo):
    """xf: (B, P, C_in, Lin) phase-split flattened input; returns the 'wide'
    GLU output (B, C_out, nm*TL) in f32."""
    batch, n_phase, c_in, _ = xf.shape
    nm = pl.cdiv(lw, tl)
    taps = tuple((ki, kj) for ki in range(kh) for kj in range(kw))
    kernel = _make_glu_conv_kernel(taps, wq, sh, sw, n_pad, c_out, tl)

    n_taps = kh * kw
    isz = xf.dtype.itemsize
    flops = 2 * batch * nm * tl * (2 * n_pad) * c_in * n_taps
    bytes_accessed = (batch * nm * (tl + halo) * n_phase * c_in * isz
                      + w_cat.size * w_cat.dtype.itemsize + b_cat.size * 4
                      + batch * nm * tl * c_out * 4)
    est_vmem = (2 * (tl + halo) * n_phase * c_in * isz * 2
                + 2 * tl * c_out * 4
                + 2 * n_pad * tl * 4
                + w_cat.size * w_cat.dtype.itemsize
                + 2 * n_pad * 128 * 4) + (1 << 20)
    vmem_limit = int(min(48 << 20, max(32 << 20, 2 * est_vmem)))

    return pl.pallas_call(
        kernel,
        out_shape=jax.ShapeDtypeStruct((batch, c_out, nm * tl), jnp.float32),
        grid=(batch, nm),
        in_specs=[
            # main spatial tile of the phase-split input
            pl.BlockSpec((None, n_phase, c_in, tl),
                         lambda b, m: (b, 0, 0, m)),
            # 128-lane-aligned right halo of the SAME array (makes every
            # in-kernel window slice static)
            pl.BlockSpec((None, n_phase, c_in, halo),
                         lambda b, m: (b, 0, 0, (m + 1) * (tl // halo))),
            # fused weights / biases: constant index -> resident across grid
            pl.BlockSpec((n_taps, 2 * n_pad, c_in), lambda b, m: (0, 0, 0)),
            pl.BlockSpec((2 * n_pad, 1), lambda b, m: (0, 0)),
        ],
        out_specs=pl.BlockSpec((None, c_out, tl), lambda b, m: (b, 0, m)),
        compiler_params=pltpu.CompilerParams(
            dimension_semantics=("parallel", "parallel"),
            vmem_limit_bytes=vmem_limit),
        cost_estimate=pl.CostEstimate(
            flops=int(flops),
            transcendentals=int(batch * nm * tl * c_out),
            bytes_accessed=int(bytes_accessed)),
    )(xf, xf, w_cat, b_cat)


# ------------------------------ glue (JAX) ----------------------------------- #
@functools.partial(jax.jit,
                   static_argnames=("stride", "padding", "compute_dtype"))
def glu_conv2d(x, w1, b1, w2, b2, *, stride, padding,
               compute_dtype=jnp.bfloat16):
    """GluConv2d forward.  x: (B, C_in, H, W) NCHW -> (B, C_out, Ho, Wo)."""
    sh, sw = stride
    ph, pw = padding
    c_out, c_in, kh, kw = w1.shape
    batch, _, h, w = x.shape

    ho = (h + 2 * ph - kh) // sh + 1
    wo = (w + 2 * pw - kw) // sw + 1
    qi_max = (kh - 1) // sh
    qj_max = (kw - 1) // sw
    hq, wq = ho + qi_max, wo + qj_max      # "wide" per-phase spatial extent
    n_phase = sh * sw
    n_pad = _round_up(max(c_out, 1), 8)    # sublane-aligned value/gate split

    # ---- input: cast, zero-pad, stride-phase split, flatten spatial (XLA) ----
    xq = x.astype(compute_dtype)
    pad_b = max(ph, sh * hq - h - ph)
    pad_r = max(pw, sw * wq - w - pw)
    xq = jnp.pad(xq, ((0, 0), (0, 0), (ph, pad_b), (pw, pad_r)))
    xq = xq[:, :, :sh * hq, :sw * wq]
    xq = xq.reshape(batch, c_in, hq, sh, wq, sw)
    xq = jnp.transpose(xq, (0, 3, 5, 1, 2, 4))       # (B, sh, sw, C, Hq, Wq)
    xq = xq.reshape(batch, n_phase, c_in, hq * wq)

    # ---- tiling over the flattened wide-output axis ----
    lw = ho * wq                                      # wide output length
    d_max = qi_max * wq + qj_max                      # max static window offset
    halo = max(128, _round_up(d_max, 128))
    tl = _pick_spatial_tile(lw, batch, halo, n_phase, c_in, c_out, n_pad,
                            jnp.dtype(compute_dtype).itemsize)
    assert tl % halo == 0 and tl % 128 == 0
    nm = pl.cdiv(lw, tl)
    lin_pad = max(hq * wq, nm * tl + halo)            # halo never reads OOB
    xq = jnp.pad(xq, ((0, 0), (0, 0), (0, 0), (0, lin_pad - hq * wq)))

    # ---- fused weights / biases (value rows [0:C_out], gate rows [Np:Np+C_out]) ----
    wz = jnp.zeros((2 * n_pad, c_in, kh, kw), jnp.float32)
    wz = wz.at[:c_out].set(w1.astype(jnp.float32))
    wz = wz.at[n_pad:n_pad + c_out].set(w2.astype(jnp.float32))
    w_cat = jnp.transpose(wz, (2, 3, 0, 1)).reshape(kh * kw, 2 * n_pad, c_in)
    w_cat = w_cat.astype(compute_dtype)
    b_cat = jnp.zeros((2 * n_pad, 1), jnp.float32)
    b_cat = b_cat.at[:c_out, 0].set(b1.astype(jnp.float32))
    b_cat = b_cat.at[n_pad:n_pad + c_out, 0].set(b2.astype(jnp.float32))

    out_wide = _glu_conv2d_pallas(
        xq, w_cat, b_cat, n_pad=n_pad, c_out=c_out, wq=wq, lw=lw,
        sh=sh, sw=sw, kh=kh, kw=kw, tl=tl, halo=halo)

    out = out_wide[:, :, :ho * wq].reshape(batch, c_out, ho, wq)
    return out[:, :, :, :wo]


# ----------------------------- reference (XLA) -------------------------------- #
def _ref_glu_conv2d(x, w1, b1, w2, b2, stride, padding):
    dn = lax.conv_dimension_numbers(x.shape, w1.shape, ("NCHW", "OIHW", "NCHW"))
    pad = [(padding[0], padding[0]), (padding[1], padding[1])]
    c1 = lax.conv_general_dilated(x, w1, stride, pad, dimension_numbers=dn)
    c2 = lax.conv_general_dilated(x, w2, stride, pad, dimension_numbers=dn)
    c1 = c1 + b1.reshape(1, -1, 1, 1)
    c2 = c2 + b2.reshape(1, -1, 1, 1)
    return c1 * jax.nn.sigmoid(c2)


# --------------------------------- main --------------------------------------- #
if __name__ == "__main__":
    key = jax.random.PRNGKey(0)

    # module config (matches nn.Conv2d shapes in __init__)
    B, C_in, H, W = 2, 4, 16, 16
    C_out = 8
    kernel_size = (3, 3)
    stride = (1, 2)
    padding = (1, 1)

    k_x, k_w1, k_b1, k_w2, k_b2 = jax.random.split(key, 5)
    x = jax.random.normal(k_x, (B, C_in, H, W), dtype=jnp.float32)

    fan_in = C_in * kernel_size[0] * kernel_size[1]
    scale = 1.0 / (fan_in ** 0.5)
    w1 = jax.random.uniform(k_w1, (C_out, C_in, *kernel_size), jnp.float32, -scale, scale)
    b1 = jax.random.uniform(k_b1, (C_out,), jnp.float32, -scale, scale)
    w2 = jax.random.uniform(k_w2, (C_out, C_in, *kernel_size), jnp.float32, -scale, scale)
    b2 = jax.random.uniform(k_b2, (C_out,), jnp.float32, -scale, scale)

    out = glu_conv2d(x, w1, b1, w2, b2, stride=stride, padding=padding)
    out = jax.block_until_ready(out)

    # True f32 reference (semantic check; tolerance bounded by the bf16 cast of
    # the MXU inputs, ~1e-2 at these magnitudes).
    ref = _ref_glu_conv2d(x, w1, b1, w2, b2, stride, padding)
    assert out.shape == ref.shape, (out.shape, ref.shape)
    assert jnp.allclose(out, ref, atol=3e-2, rtol=3e-2), \
        float(jnp.max(jnp.abs(out - ref)))

    # Quantization-matched reference (tight check of the fused conv + GLU math:
    # same bf16-rounded inputs, f32 accumulation, exact sigmoid).
    q = lambda a: a.astype(jnp.bfloat16).astype(jnp.float32)
    ref_q = _ref_glu_conv2d(q(x), q(w1), b1, q(w2), b2, stride, padding)
    assert jnp.allclose(out, ref_q, atol=2e-3, rtol=2e-3), \
        float(jnp.max(jnp.abs(out - ref_q)))

    print("KERNEL_OK")
</pallas_src>

<mosaic_0001>
module attributes {stable_mosaic.version = 11 : i64} {
  func.func @kernel(%arg0: i32, %arg1: i32, %arg2: memref<1x2x4x256xbf16, #tpu.memory_space<vmem>>, %arg3: memref<1x2x4x128xbf16, #tpu.memory_space<vmem>>, %arg4: memref<9x16x4xbf16, #tpu.memory_space<vmem>>, %arg5: memref<16x1xf32, #tpu.memory_space<vmem>>, %arg6: memref<1x8x256xf32, #tpu.memory_space<vmem>>) attributes {dimension_semantics = [#tpu.dimension_semantics<parallel>, #tpu.dimension_semantics<parallel>], iteration_bounds = array<i64: 2, 1>, scalar_prefetch = 0 : i64, scratch_operands = 0 : i64, tpu.core_type = #tpu.core_type<tc>, window_params = [{transform_indices = @transform_0, window_bounds = array<i64: 1, 2, 4, 256>}, {transform_indices = @transform_1, window_bounds = array<i64: 1, 2, 4, 128>}, {pipeline_mode = #tpu.pipeline_mode<synchronous>, transform_indices = @transform_2, window_bounds = array<i64: 9, 16, 4>}, {pipeline_mode = #tpu.pipeline_mode<synchronous>, transform_indices = @transform_3, window_bounds = array<i64: 16, 1>}, {transform_indices = @transform_4, window_bounds = array<i64: 1, 8, 256>}]} {
    %c0 = arith.constant 0 : index
    %c0_0 = arith.constant 0 : index
    %c0_1 = arith.constant 0 : index
    %c0_2 = arith.constant 0 : index
    %0 = vector.load %arg2[%c0, %c0_0, %c0_1, %c0_2] : memref<1x2x4x256xbf16, #tpu.memory_space<vmem>>, vector<1x1x4x256xbf16>
    %1 = vector.shape_cast %0 : vector<1x1x4x256xbf16> to vector<4x256xbf16>
    %c0_3 = arith.constant 0 : index
    %c0_4 = arith.constant 0 : index
    %c0_5 = arith.constant 0 : index
    %c0_6 = arith.constant 0 : index
    %2 = vector.load %arg3[%c0_3, %c0_4, %c0_5, %c0_6] : memref<1x2x4x128xbf16, #tpu.memory_space<vmem>>, vector<1x1x4x128xbf16>
    %3 = vector.shape_cast %2 : vector<1x1x4x128xbf16> to vector<4x128xbf16>
    %4 = tpu.concatenate %1, %3 in 1 : vector<4x256xbf16>, vector<4x128xbf16> -> vector<4x384xbf16>
    %c0_7 = arith.constant 0 : index
    %c1 = arith.constant 1 : index
    %c0_8 = arith.constant 0 : index
    %c0_9 = arith.constant 0 : index
    %5 = vector.load %arg2[%c0_7, %c1, %c0_8, %c0_9] : memref<1x2x4x256xbf16, #tpu.memory_space<vmem>>, vector<1x1x4x256xbf16>
    %6 = vector.shape_cast %5 : vector<1x1x4x256xbf16> to vector<4x256xbf16>
    %c0_10 = arith.constant 0 : index
    %c1_11 = arith.constant 1 : index
    %c0_12 = arith.constant 0 : index
    %c0_13 = arith.constant 0 : index
    %7 = vector.load %arg3[%c0_10, %c1_11, %c0_12, %c0_13] : memref<1x2x4x128xbf16, #tpu.memory_space<vmem>>, vector<1x1x4x128xbf16>
    %8 = vector.shape_cast %7 : vector<1x1x4x128xbf16> to vector<4x128xbf16>
    %9 = tpu.concatenate %6, %8 in 1 : vector<4x256xbf16>, vector<4x128xbf16> -> vector<4x384xbf16>
    %c0_14 = arith.constant 0 : index
    %c0_15 = arith.constant 0 : index
    %10 = vector.load %arg5[%c0_14, %c0_15] : memref<16x1xf32, #tpu.memory_space<vmem>>, vector<16x1xf32>
    %11 = vector.shape_cast %10 : vector<16x1xf32> to vector<16x1xf32>
    %12 = vector.broadcast %11 : vector<16x1xf32> to vector<16x256xf32>
    %13 = vector.extract_strided_slice %4 {offsets = [0, 0], sizes = [4, 256], strides = [1, 1]} : vector<4x384xbf16> to vector<4x256xbf16>
    %c0_16 = arith.constant 0 : index
    %c0_17 = arith.constant 0 : index
    %c0_18 = arith.constant 0 : index
    %14 = vector.load %arg4[%c0_16, %c0_17, %c0_18] : memref<9x16x4xbf16, #tpu.memory_space<vmem>>, vector<1x16x4xbf16>
    %15 = vector.shape_cast %14 : vector<1x16x4xbf16> to vector<16x4xbf16>
    %cst = arith.constant dense<0.000000e+00> : vector<16x256xf32>
    %16 = tpu.matmul %15, %13, %cst {dimension_numbers = #tpu.dot_dimension_numbers<[1], [0], [0], [1], [0, 0, 1, 1], [], []>} : vector<16x4xbf16>, vector<4x256xbf16>, vector<16x256xf32> -> vector<16x256xf32>
    %17 = arith.addf %12, %16 : vector<16x256xf32>
    %18 = vector.extract_strided_slice %9 {offsets = [0, 0], sizes = [4, 256], strides = [1, 1]} : vector<4x384xbf16> to vector<4x256xbf16>
    %c1_19 = arith.constant 1 : index
    %c0_20 = arith.constant 0 : index
    %c0_21 = arith.constant 0 : index
    %19 = vector.load %arg4[%c1_19, %c0_20, %c0_21] : memref<9x16x4xbf16, #tpu.memory_space<vmem>>, vector<1x16x4xbf16>
    %20 = vector.shape_cast %19 : vector<1x16x4xbf16> to vector<16x4xbf16>
    %cst_22 = arith.constant dense<0.000000e+00> : vector<16x256xf32>
    %21 = tpu.matmul %20, %18, %cst_22 {dimension_numbers = #tpu.dot_dimension_numbers<[1], [0], [0], [1], [0, 0, 1, 1], [], []>} : vector<16x4xbf16>, vector<4x256xbf16>, vector<16x256xf32> -> vector<16x256xf32>
    %22 = arith.addf %17, %21 : vector<16x256xf32>
    %23 = vector.extract_strided_slice %4 {offsets = [0, 1], sizes = [4, 256], strides = [1, 1]} : vector<4x384xbf16> to vector<4x256xbf16>
    %c2 = arith.constant 2 : index
    %c0_23 = arith.constant 0 : index
    %c0_24 = arith.constant 0 : index
    %24 = vector.load %arg4[%c2, %c0_23, %c0_24] : memref<9x16x4xbf16, #tpu.memory_space<vmem>>, vector<1x16x4xbf16>
    %25 = vector.shape_cast %24 : vector<1x16x4xbf16> to vector<16x4xbf16>
    %cst_25 = arith.constant dense<0.000000e+00> : vector<16x256xf32>
    %26 = tpu.matmul %25, %23, %cst_25 {dimension_numbers = #tpu.dot_dimension_numbers<[1], [0], [0], [1], [0, 0, 1, 1], [], []>} : vector<16x4xbf16>, vector<4x256xbf16>, vector<16x256xf32> -> vector<16x256xf32>
    %27 = arith.addf %22, %26 : vector<16x256xf32>
    %28 = vector.extract_strided_slice %4 {offsets = [0, 9], sizes = [4, 256], strides = [1, 1]} : vector<4x384xbf16> to vector<4x256xbf16>
    %c3 = arith.constant 3 : index
    %c0_26 = arith.constant 0 : index
    %c0_27 = arith.constant 0 : index
    %29 = vector.load %arg4[%c3, %c0_26, %c0_27] : memref<9x16x4xbf16, #tpu.memory_space<vmem>>, vector<1x16x4xbf16>
    %30 = vector.shape_cast %29 : vector<1x16x4xbf16> to vector<16x4xbf16>
    %cst_28 = arith.constant dense<0.000000e+00> : vector<16x256xf32>
    %31 = tpu.matmul %30, %28, %cst_28 {dimension_numbers = #tpu.dot_dimension_numbers<[1], [0], [0], [1], [0, 0, 1, 1], [], []>} : vector<16x4xbf16>, vector<4x256xbf16>, vector<16x256xf32> -> vector<16x256xf32>
    %32 = arith.addf %27, %31 : vector<16x256xf32>
    %33 = vector.extract_strided_slice %9 {offsets = [0, 9], sizes = [4, 256], strides = [1, 1]} : vector<4x384xbf16> to vector<4x256xbf16>
    %c4 = arith.constant 4 : index
    %c0_29 = arith.constant 0 : index
    %c0_30 = arith.constant 0 : index
    %34 = vector.load %arg4[%c4, %c0_29, %c0_30] : memref<9x16x4xbf16, #tpu.memory_space<vmem>>, vector<1x16x4xbf16>
    %35 = vector.shape_cast %34 : vector<1x16x4xbf16> to vector<16x4xbf16>
    %cst_31 = arith.constant dense<0.000000e+00> : vector<16x256xf32>
    %36 = tpu.matmul %35, %33, %cst_31 {dimension_numbers = #tpu.dot_dimension_numbers<[1], [0], [0], [1], [0, 0, 1, 1], [], []>} : vector<16x4xbf16>, vector<4x256xbf16>, vector<16x256xf32> -> vector<16x256xf32>
    %37 = arith.addf %32, %36 : vector<16x256xf32>
    %38 = vector.extract_strided_slice %4 {offsets = [0, 10], sizes = [4, 256], strides = [1, 1]} : vector<4x384xbf16> to vector<4x256xbf16>
    %c5 = arith.constant 5 : index
    %c0_32 = arith.constant 0 : index
    %c0_33 = arith.constant 0 : index
    %39 = vector.load %arg4[%c5, %c0_32, %c0_33] : memref<9x16x4xbf16, #tpu.memory_space<vmem>>, vector<1x16x4xbf16>
    %40 = vector.shape_cast %39 : vector<1x16x4xbf16> to vector<16x4xbf16>
    %cst_34 = arith.constant dense<0.000000e+00> : vector<16x256xf32>
    %41 = tpu.matmul %40, %38, %cst_34 {dimension_numbers = #tpu.dot_dimension_numbers<[1], [0], [0], [1], [0, 0, 1, 1], [], []>} : vector<16x4xbf16>, vector<4x256xbf16>, vector<16x256xf32> -> vector<16x256xf32>
    %42 = arith.addf %37, %41 : vector<16x256xf32>
    %43 = vector.extract_strided_slice %4 {offsets = [0, 18], sizes = [4, 256], strides = [1, 1]} : vector<4x384xbf16> to vector<4x256xbf16>
    %c6 = arith.constant 6 : index
    %c0_35 = arith.constant 0 : index
    %c0_36 = arith.constant 0 : index
    %44 = vector.load %arg4[%c6, %c0_35, %c0_36] : memref<9x16x4xbf16, #tpu.memory_space<vmem>>, vector<1x16x4xbf16>
    %45 = vector.shape_cast %44 : vector<1x16x4xbf16> to vector<16x4xbf16>
    %cst_37 = arith.constant dense<0.000000e+00> : vector<16x256xf32>
    %46 = tpu.matmul %45, %43, %cst_37 {dimension_numbers = #tpu.dot_dimension_numbers<[1], [0], [0], [1], [0, 0, 1, 1], [], []>} : vector<16x4xbf16>, vector<4x256xbf16>, vector<16x256xf32> -> vector<16x256xf32>
    %47 = arith.addf %42, %46 : vector<16x256xf32>
    %48 = vector.extract_strided_slice %9 {offsets = [0, 18], sizes = [4, 256], strides = [1, 1]} : vector<4x384xbf16> to vector<4x256xbf16>
    %c7 = arith.constant 7 : index
    %c0_38 = arith.constant 0 : index
    %c0_39 = arith.constant 0 : index
    %49 = vector.load %arg4[%c7, %c0_38, %c0_39] : memref<9x16x4xbf16, #tpu.memory_space<vmem>>, vector<1x16x4xbf16>
    %50 = vector.shape_cast %49 : vector<1x16x4xbf16> to vector<16x4xbf16>
    %cst_40 = arith.constant dense<0.000000e+00> : vector<16x256xf32>
    %51 = tpu.matmul %50, %48, %cst_40 {dimension_numbers = #tpu.dot_dimension_numbers<[1], [0], [0], [1], [0, 0, 1, 1], [], []>} : vector<16x4xbf16>, vector<4x256xbf16>, vector<16x256xf32> -> vector<16x256xf32>
    %52 = arith.addf %47, %51 : vector<16x256xf32>
    %53 = vector.extract_strided_slice %4 {offsets = [0, 19], sizes = [4, 256], strides = [1, 1]} : vector<4x384xbf16> to vector<4x256xbf16>
    %c8 = arith.constant 8 : index
    %c0_41 = arith.constant 0 : index
    %c0_42 = arith.constant 0 : index
    %54 = vector.load %arg4[%c8, %c0_41, %c0_42] : memref<9x16x4xbf16, #tpu.memory_space<vmem>>, vector<1x16x4xbf16>
    %55 = vector.shape_cast %54 : vector<1x16x4xbf16> to vector<16x4xbf16>
    %cst_43 = arith.constant dense<0.000000e+00> : vector<16x256xf32>
    %56 = tpu.matmul %55, %53, %cst_43 {dimension_numbers = #tpu.dot_dimension_numbers<[1], [0], [0], [1], [0, 0, 1, 1], [], []>} : vector<16x4xbf16>, vector<4x256xbf16>, vector<16x256xf32> -> vector<16x256xf32>
    %57 = arith.addf %52, %56 : vector<16x256xf32>
    %58 = vector.extract_strided_slice %57 {offsets = [0, 0], sizes = [8, 256], strides = [1, 1]} : vector<16x256xf32> to vector<8x256xf32>
    %59 = vector.extract_strided_slice %57 {offsets = [8, 0], sizes = [8, 256], strides = [1, 1]} : vector<16x256xf32> to vector<8x256xf32>
    %cst_44 = arith.constant 0.000000e+00 : f32
    %60 = vector.broadcast %cst_44 : f32 to vector<8x256xf32>
    %61 = arith.subf %60, %59 : vector<8x256xf32>
    %62 = math.exp %61 : vector<8x256xf32>
    %cst_45 = arith.constant 1.000000e+00 : f32
    %63 = vector.broadcast %cst_45 : f32 to vector<8x256xf32>
    %64 = arith.addf %63, %62 : vector<8x256xf32>
    %cst_46 = arith.constant 1.000000e+00 : f32
    %65 = vector.broadcast %cst_46 : f32 to vector<8x256xf32>
    %66 = arith.divf %65, %64 : vector<8x256xf32>
    %67 = arith.mulf %58, %66 : vector<8x256xf32>
    %c0_47 = arith.constant 0 : index
    %c0_48 = arith.constant 0 : index
    %c0_49 = arith.constant 0 : index
    %68 = vector.load %arg6[%c0_47, %c0_48, %c0_49] : memref<1x8x256xf32, #tpu.memory_space<vmem>>, vector<1x8x256xf32>
    %69 = vector.shape_cast %68 : vector<1x8x256xf32> to vector<8x256xf32>
    %70 = vector.shape_cast %67 : vector<8x256xf32> to vector<1x8x256xf32>
    tpu.vector_store %arg6[%c0_47, %c0_48, %c0_49], %70 {strides = array<i32>} : memref<1x8x256xf32, #tpu.memory_space<vmem>>, vector<1x8x256xf32>,
    return
  }
  func.func @transform_0(%arg0: i32, %arg1: i32) -> (i32, i32, i32, i32) {
    %c0_i32 = arith.constant 0 : i32
    %c0_i32_0 = arith.constant 0 : i32
    %c0_i32_1 = arith.constant 0 : i32
    return %arg0, %c0_i32, %c0_i32_0, %arg1 : i32, i32, i32, i32
  }
  func.func @transform_1(%arg0: i32, %arg1: i32) -> (i32, i32, i32, i32) {
    %c1_i32 = arith.constant 1 : i32
    %0 = arith.addi %arg1, %c1_i32 : i32
    %c2_i32 = arith.constant 2 : i32
    %1 = arith.muli %0, %c2_i32 : i32
    %c0_i32 = arith.constant 0 : i32
    %c0_i32_0 = arith.constant 0 : i32
    %c0_i32_1 = arith.constant 0 : i32
    return %arg0, %c0_i32, %c0_i32_0, %1 : i32, i32, i32, i32
  }
  func.func @transform_2(%arg0: i32, %arg1: i32) -> (i32, i32, i32) {
    %c0_i32 = arith.constant 0 : i32
    %c0_i32_0 = arith.constant 0 : i32
    %c0_i32_1 = arith.constant 0 : i32
    %c0_i32_2 = arith.constant 0 : i32
    return %c0_i32, %c0_i32_0, %c0_i32_1 : i32, i32, i32
  }
  func.func @transform_3(%arg0: i32, %arg1: i32) -> (i32, i32) {
    %c0_i32 = arith.constant 0 : i32
    %c0_i32_0 = arith.constant 0 : i32
    %c0_i32_1 = arith.constant 0 : i32
    return %c0_i32, %c0_i32_0 : i32, i32
  }
  func.func @transform_4(%arg0: i32, %arg1: i32) -> (i32, i32, i32) {
    %c0_i32 = arith.constant 0 : i32
    %c0_i32_0 = arith.constant 0 : i32
    return %arg0, %c0_i32, %arg1 : i32, i32, i32
  }
}

</mosaic_0001>

<llo_original>
// kernel: glu_conv2d.1
$region0: #{glu_conv2d.1}
  #allocation0 [shape = 'u32[]', space=smem, size = 0x4, offset = 0x4, fixed_abs, tag = 'smem constant byte address 0x4 - core index']
  #allocation1 [shape = 'u32[144,128]{1,0:T(1,128)}', space=vmem, size = 0x12000, scoped, tag = 'internal scratch']
  %s0 = inlined_call_operand.vmem [shape: bf16[2,2,4,384], index: 0, kind: input, shape index: {}, may-alias: {0,1}]
  %s1 = inlined_call_operand.vmem [shape: bf16[2,2,4,384], index: 1, kind: input, shape index: {}, may-alias: {0,1}]
  %s2 = inlined_call_operand.vmem [shape: bf16[9,16,4], index: 2, kind: input, shape index: {}]
  %s3 = inlined_call_operand.vmem [shape: f32[16,1], index: 3, kind: input, shape index: {}]
  %s4 = inlined_call_operand.vmem [shape: f32[2,8,256], index: 4, kind: output, shape index: {}]
  %s5 = sld [smem:[#allocation0]]
  $region149: #{glu_conv2d.1} parent=0
    _
  %s7 = ssub.s32 1, %s5
  %s8 = scalar_select 0, %s7, %s5
  $region1: #{glu_conv2d.1} parent=0
    #allocation2 [shape = 'u8[8192]{0}', space=vmem, size = 0x2000, scoped, tag = 'input window, operand 0']
    #allocation3 [shape = 'u8[4096]{0}', space=vmem, size = 0x1000, scoped, tag = 'input window, operand 1']
    loop: start=0, step=1, limit=4
    $region2: #{glu_conv2d.1} parent=1 // loop_pre_header
      _
    $region3: #{glu_conv2d.1} parent=1 // loop_header
      %s10 = sphi 0, %s14
      %p11 = scmp.ge.s32.totalorder %s10, 4
      %s17 = sphi 0, %s29
      %s18 = sphi 0, %s25
      %s19 = sphi 0, %s17
      %s20 = sphi 0, %s18
      %s21 = sphi 0, %s19
      %s22 = sphi 0, %s20
      %s34 = sphi 0, %s36
      %s37 = sphi 0, %s34
      %s38 = sphi 0, %s37
      %s54 = sphi 0, %s38
      %s66 = sphi 0, %s68
      %s69 = sphi 0, %s66
      %s70 = sphi 0, %s69
      %s86 = sphi 0, %s70
      %s90 = sphi 0, %s90
      %s92 = sphi 0, %s90
      %s93 = sphi 0, %s92
      %s107 = sphi 0, %s93
      %s111 = sphi 0, %s111
      %s113 = sphi 0, %s111
      %s114 = sphi 0, %s113
      %s128 = sphi 0, %s114
      %s136 = sphi 0, %s138
      %s139 = sphi 0, %s136
      %s140 = sphi 0, %s139
      %s156 = sphi 0, %s140
    $region4: #{glu_conv2d.1} parent=1 // loop_header_branch
      %13 = sbr.rel (%p11) target = $region8
    $region5: #{glu_conv2d.1} parent=1 // loop_body
      %s15 = ssub.s32 %s10, 1
      %s16 = ssub.s32 %s10, 2
      %s23 = sadd.s32 1, %s18
      %p24 = scmp.ge.s32.totalorder %s23, 1
      %s25 = scalar_select %p24, 0, %s23
      %s26 = sadd.s32 1, %s17
      %s27 = scalar_select %p24, %s26, %s17
      %p28 = scmp.ge.s32.totalorder %s27, 2
      %s29 = scalar_select %p28, 0, %s27
      %s30 = ssub.s32 %s17, %s29
      %s31 = ssub.s32 %s18, %s25
      %s32 = sor.u32 %s30, %s31
      %p33 = scmp.eq.s32.totalorder %s32, 0
      %s35 = sadd.s32 %s34, 1
      %s36 = scalar_select %p33, %s34, %s35
      %p39 = pneg %p33
      %p40 = scmp.eq.s32.totalorder %s10, 1
      %p41 = por %p39, %p40
      %p42 = scmp.ne.s32.totalorder %s34, %s37
      %p43 = scmp.eq.s32.totalorder %s10, 0
      %p44 = por %p42, %p43
      %p45 = scmp.ne.s32.totalorder %s34, %s37
      %p46 = scmp.eq.s32.totalorder %s15, 1
      %p47 = por %p45, %p46
      %p48 = scmp.ne.s32.totalorder %s37, %s38
      %p49 = scmp.eq.s32.totalorder %s15, 0
      %p50 = por %p48, %p49
      %p51 = scmp.ne.s32.totalorder %s37, %s38
      %p52 = scmp.eq.s32.totalorder %s16, 1
      %p53 = por %p51, %p52
      %p55 = scmp.ne.s32.totalorder %s38, %s54
      %p56 = scmp.eq.s32.totalorder %s16, 0
      %p57 = por %p55, %p56
      %s58 = sadd.s32 %s18, 1
      %s59 = smul.u32 %s58, 2
      %s60 = sadd.s32 %s25, 1
      %s61 = smul.u32 %s60, 2
      %s62 = ssub.s32 %s17, %s29
      %s63 = ssub.s32 %s59, %s61
      %s64 = sor.u32 %s62, %s63
      %p65 = scmp.eq.s32.totalorder %s64, 0
      %s67 = sadd.s32 %s66, 1
      %s68 = scalar_select %p65, %s66, %s67
      %p71 = pneg %p65
      %p72 = scmp.eq.s32.totalorder %s10, 1
      %p73 = por %p71, %p72
      %p74 = scmp.ne.s32.totalorder %s66, %s69
      %p75 = scmp.eq.s32.totalorder %s10, 0
      %p76 = por %p74, %p75
      %p77 = scmp.ne.s32.totalorder %s66, %s69
      %p78 = scmp.eq.s32.totalorder %s15, 1
      %p79 = por %p77, %p78
      %p80 = scmp.ne.s32.totalorder %s69, %s70
      %p81 = scmp.eq.s32.totalorder %s15, 0
      %p82 = por %p80, %p81
      %p83 = scmp.ne.s32.totalorder %s69, %s70
      %p84 = scmp.eq.s32.totalorder %s16, 1
      %p85 = por %p83, %p84
      %p87 = scmp.ne.s32.totalorder %s70, %s86
      %p88 = scmp.eq.s32.totalorder %s16, 0
      %p89 = por %p87, %p88
      %s91 = sadd.s32 %s90, 1
      %p94 = scmp.eq.s32.totalorder %s10, 1
      %p95 = scmp.ne.s32.totalorder %s90, %s92
      %p96 = scmp.eq.s32.totalorder %s10, 0
      %p97 = por %p95, %p96
      %p98 = scmp.ne.s32.totalorder %s90, %s92
      %p99 = scmp.eq.s32.totalorder %s15, 1
      %p100 = por %p98, %p99
      %p101 = scmp.ne.s32.totalorder %s92, %s93
      %p102 = scmp.eq.s32.totalorder %s15, 0
      %p103 = por %p101, %p102
      %p104 = scmp.ne.s32.totalorder %s92, %s93
      %p105 = scmp.eq.s32.totalorder %s16, 1
      %p106 = por %p104, %p105
      %p108 = scmp.ne.s32.totalorder %s93, %s107
      %p109 = scmp.eq.s32.totalorder %s16, 0
      %p110 = por %p108, %p109
      %s112 = sadd.s32 %s111, 1
      %p115 = scmp.eq.s32.totalorder %s10, 1
      %p116 = scmp.ne.s32.totalorder %s111, %s113
      %p117 = scmp.eq.s32.totalorder %s10, 0
      %p118 = por %p116, %p117
      %p119 = scmp.ne.s32.totalorder %s111, %s113
      %p120 = scmp.eq.s32.totalorder %s15, 1
      %p121 = por %p119, %p120
      %p122 = scmp.ne.s32.totalorder %s113, %s114
      %p123 = scmp.eq.s32.totalorder %s15, 0
      %p124 = por %p122, %p123
      %p125 = scmp.ne.s32.totalorder %s113, %s114
      %p126 = scmp.eq.s32.totalorder %s16, 1
      %p127 = por %p125, %p126
      %p129 = scmp.ne.s32.totalorder %s114, %s128
      %p130 = scmp.eq.s32.totalorder %s16, 0
      %p131 = por %p129, %p130
      %s132 = ssub.s32 %s17, %s29
      %s133 = ssub.s32 %s18, %s25
      %s134 = sor.u32 %s132, %s133
      %p135 = scmp.eq.s32.totalorder %s134, 0
      %s137 = sadd.s32 %s136, 1
      %s138 = scalar_select %p135, %s136, %s137
      %p141 = pneg %p135
      %p142 = scmp.eq.s32.totalorder %s10, 1
      %p143 = por %p141, %p142
      %p144 = scmp.ne.s32.totalorder %s136, %s139
      %p145 = scmp.eq.s32.totalorder %s10, 0
      %p146 = por %p144, %p145
      %p147 = scmp.ne.s32.totalorder %s136, %s139
      %p148 = scmp.eq.s32.totalorder %s15, 1
      %p149 = por %p147, %p148
      %p150 = scmp.ne.s32.totalorder %s139, %s140
      %p151 = scmp.eq.s32.totalorder %s15, 0
      %p152 = por %p150, %p151
      %p153 = scmp.ne.s32.totalorder %s139, %s140
      %p154 = scmp.eq.s32.totalorder %s16, 1
      %p155 = por %p153, %p154
      %p157 = scmp.ne.s32.totalorder %s140, %s156
      %p158 = scmp.eq.s32.totalorder %s16, 0
      %p159 = por %p157, %p158
      %p160 = scmp.le.s32.totalorder 1, %s10
      %p161 = scmp.lt.s32.totalorder %s10, 3
      %p162 = pnand %p160, %p161
      %p163 = pneg %p162
      // Predicated region
      $region9: #{glu_conv2d.1} parent=5 // pred_check
        _
      $region10: #{glu_conv2d.1} parent=5 // pred_check_branch
        %165 = sbr.rel (%p162) target = $region12
      $region11: #{glu_conv2d.1} parent=5 // pred_region
        %s166 = ssub.s32 %s10, 1
        // Predicated region
        $region13: #{glu_conv2d.1} parent=11 // pred_check
          %p167 = pneg %p103
        $region14: #{glu_conv2d.1} parent=11 // pred_check_branch
          %169 = sbr.rel (%p167) target = $region16
        $region15: #{glu_conv2d.1} parent=11 // pred_region
          _
        $region16: #{glu_conv2d.1} parent=11 // pred_fallthru
          _
        // Predicated region
        $region17: #{glu_conv2d.1} parent=11 // pred_check
          %p170 = pneg %p124
        $region18: #{glu_conv2d.1} parent=11 // pred_check_branch
          %172 = sbr.rel (%p170) target = $region20
        $region19: #{glu_conv2d.1} parent=11 // pred_region
          _
        $region20: #{glu_conv2d.1} parent=11 // pred_fallthru
          _
      $region12: #{glu_conv2d.1} parent=5 // pred_fallthru
        _
      %p173 = scmp.lt.s32.totalorder %s10, 2
      // Predicated region
      $region21: #{glu_conv2d.1} parent=5 // pred_check
        %p174 = pneg %p173
      $region22: #{glu_conv2d.1} parent=5 // pred_check_branch
        %176 = sbr.rel (%p174) target = $region24
      $region23: #{glu_conv2d.1} parent=5 // pred_region
        // Predicated region
        $region25: #{glu_conv2d.1} parent=23 // pred_check
          %p177 = pneg %p44
        $region26: #{glu_conv2d.1} parent=23 // pred_check_branch
          %179 = sbr.rel (%p177) target = $region28
        $region27: #{glu_conv2d.1} parent=23 // pred_region
          %s180 = sand.u32 %s34, 1
          %s181 = sand.u32 %s34, 1
          %s182 = smul.addr %s181, 8
          %s183 = scalar_lea.vmem [#allocation2], %s182
          %s184 = smul.u32 2, %s18
          %s185 = ssub.s32 3, %s184
          %p186 = scmp.lt.s32.totalorder %s185, 2
          %s187 = scalar_select %p186, %s185, 2
          %s188 = smul.u32 64, %s187
          %p189 = scmp.ne.s32.totalorder 0, %s188
          %s190 = smul.addr %s17, 6
          %s191 = sadd.s32 %s184, %s190
          %s192 = smul.addr %s191, 2
          %s193 = scalar_lea.vmem %s0, %s192
          %s194 = smul.u32 %s187, 2
          // Predicated region
          $region29: #{glu_conv2d.1} parent=27 // pred_check
            %p195 = pneg %p189
          $region30: #{glu_conv2d.1} parent=27 // pred_check_branch
            %197 = sbr.rel (%p195) target = $region32
          $region31: #{glu_conv2d.1} parent=27 // pred_region
            %p198 = scmp.lt.u32.totalorder %s194, 8
            %p199 = pneg %p198
            // Predicated region
            $region33: #{glu_conv2d.1} parent=31 // pred_check
              _
            $region34: #{glu_conv2d.1} parent=31 // pred_check_branch
              %201 = sbr.rel (%p198) target = $region36
            $region35: #{glu_conv2d.1} parent=31 // pred_region
              %s219 = sand.u32 %s194, 7
              %p220 = scmp.eq.s32.totalorder %s219, 0
              // Predicated region
              $region48: #{glu_conv2d.1} parent=35 // pred_check
                %p221 = pneg %p220
              $region49: #{glu_conv2d.1} parent=35 // pred_check_branch
                %223 = sbr.rel (%p221) target = $region51
              $region50: #{glu_conv2d.1} parent=35 // pred_region
                %s224 = sshrl.u32 %s194, 3
                %s225 = sshrl.u32 %s224, 5
                // While loop
                $region52: #{glu_conv2d.1} parent=50 // loop_pre_header
                  _
                $region53: #{glu_conv2d.1} parent=50 // loop_header
                  %s229 = sphi 0, %s231
                  %p230 = scmp.ge.s32.totalorder %s229, %s225
                  %s234 = sphi 0, %s367
                  %s235 = sphi %s193, %s370
                  %s236 = sphi %s183, %s371
                $region54: #{glu_conv2d.1} parent=50 // loop_header_branch
                  %233 = sbr.rel (%p230) target = $region58
                $region55: #{glu_conv2d.1} parent=50 // loop_body
                  %v237 = vld [vmem:[%s235] sm:$0xff]
                  %238 = vst [vmem:[%s236] sm:$0xff] %v237
                  %v239 = vld [vmem:[%s235 + $0x8] sm:$0xff]
                  %240 = vst [vmem:[%s236 + $0x8] sm:$0xff] %v239
                  %v241 = vld [vmem:[%s235 + $0x10] sm:$0xff]
                  %242 = vst [vmem:[%s236 + $0x10] sm:$0xff] %v241
                  %v243 = vld [vmem:[%s235 + $0x18] sm:$0xff]
                  %244 = vst [vmem:[%s236 + $0x18] sm:$0xff] %v243
                  %v245 = vld [vmem:[%s235 + $0x20] sm:$0xff]
                  %246 = vst [vmem:[%s236 + $0x20] sm:$0xff] %v245
                  %v247 = vld [vmem:[%s235 + $0x28] sm:$0xff]
                  %248 = vst [vmem:[%s236 + $0x28] sm:$0xff] %v247
                  %v249 = vld [vmem:[%s235 + $0x30] sm:$0xff]
                  %250 = vst [vmem:[%s236 + $0x30] sm:$0xff] %v249
                  %v251 = vld [vmem:[%s235 + $0x38] sm:$0xff]
                  %252 = vst [vmem:[%s236 + $0x38] sm:$0xff] %v251
                  %v253 = vld [vmem:[%s235 + $0x40] sm:$0xff]
                  %254 = vst [vmem:[%s236 + $0x40] sm:$0xff] %v253
                  %v255 = vld [vmem:[%s235 + $0x48] sm:$0xff]
                  %256 = vst [vmem:[%s236 + $0x48] sm:$0xff] %v255
                  %v257 = vld [vmem:[%s235 + $0x50] sm:$0xff]
                  %258 = vst [vmem:[%s236 + $0x50] sm:$0xff] %v257
                  %v259 = vld [vmem:[%s235 + $0x58] sm:$0xff]
                  %260 = vst [vmem:[%s236 + $0x58] sm:$0xff] %v259
                  %v261 = vld [vmem:[%s235 + $0x60] sm:$0xff]
                  %262 = vst [vmem:[%s236 + $0x60] sm:$0xff] %v261
                  %v263 = vld [vmem:[%s235 + $0x68] sm:$0xff]
                  %264 = vst [vmem:[%s236 + $0x68] sm:$0xff] %v263
                  %v265 = vld [vmem:[%s235 + $0x70] sm:$0xff]
                  %266 = vst [vmem:[%s236 + $0x70] sm:$0xff] %v265
                  %v267 = vld [vmem:[%s235 + $0x78] sm:$0xff]
                  %268 = vst [vmem:[%s236 + $0x78] sm:$0xff] %v267
                  %v269 = vld [vmem:[%s235 + $0x80] sm:$0xff]
                  %270 = vst [vmem:[%s236 + $0x80] sm:$0xff] %v269
                  %v271 = vld [vmem:[%s235 + $0x88] sm:$0xff]
                  %272 = vst [vmem:[%s236 + $0x88] sm:$0xff] %v271
                  %v273 = vld [vmem:[%s235 + $0x90] sm:$0xff]
                  %274 = vst [vmem:[%s236 + $0x90] sm:$0xff] %v273
                  %v275 = vld [vmem:[%s235 + $0x98] sm:$0xff]
                  %276 = vst [vmem:[%s236 + $0x98] sm:$0xff] %v275
                  %v277 = vld [vmem:[%s235 + $0xa0] sm:$0xff]
                  %278 = vst [vmem:[%s236 + $0xa0] sm:$0xff] %v277
                  %v279 = vld [vmem:[%s235 + $0xa8] sm:$0xff]
                  %280 = vst [vmem:[%s236 + $0xa8] sm:$0xff] %v279
                  %v281 = vld [vmem:[%s235 + $0xb0] sm:$0xff]
                  %282 = vst [vmem:[%s236 + $0xb0] sm:$0xff] %v281
                  %v283 = vld [vmem:[%s235 + $0xb8] sm:$0xff]
                  %284 = vst [vmem:[%s236 + $0xb8] sm:$0xff] %v283
                  %v285 = vld [vmem:[%s235 + $0xc0] sm:$0xff]
                  %286 = vst [vmem:[%s236 + $0xc0] sm:$0xff] %v285
                  %v287 = vld [vmem:[%s235 + $0xc8] sm:$0xff]
                  %288 = vst [vmem:[%s236 + $0xc8] sm:$0xff] %v287
                  %v289 = vld [vmem:[%s235 + $0xd0] sm:$0xff]
                  %290 = vst [vmem:[%s236 + $0xd0] sm:$0xff] %v289
                  %v291 = vld [vmem:[%s235 + $0xd8] sm:$0xff]
                  %292 = vst [vmem:[%s236 + $0xd8] sm:$0xff] %v291
                  %v293 = vld [vmem:[%s235 + $0xe0] sm:$0xff]
                  %294 = vst [vmem:[%s236 + $0xe0] sm:$0xff] %v293
                  %v295 = vld [vmem:[%s235 + $0xe8] sm:$0xff]
                  %296 = vst [vmem:[%s236 + $0xe8] sm:$0xff] %v295
                  %v297 = vld [vmem:[%s235 + $0xf0] sm:$0xff]
                  %298 = vst [vmem:[%s236 + $0xf0] sm:$0xff] %v297
                  %v299 = vld [vmem:[%s235 + $0xf8] sm:$0xff]
                  %300 = vst [vmem:[%s236 + $0xf8] sm:$0xff] %v299
                  %v301 = vld [vmem:[%s235 + $0x6] sm:$0xff]
                  %302 = vst [vmem:[%s236 + $0x4] sm:$0xff] %v301
                  %v303 = vld [vmem:[%s235 + $0xe] sm:$0xff]
                  %304 = vst [vmem:[%s236 + $0xc] sm:$0xff] %v303
                  %v305 = vld [vmem:[%s235 + $0x16] sm:$0xff]
                  %306 = vst [vmem:[%s236 + $0x14] sm:$0xff] %v305
                  %v307 = vld [vmem:[%s235 + $0x1e] sm:$0xff]
                  %308 = vst [vmem:[%s236 + $0x1c] sm:$0xff] %v307
                  %v309 = vld [vmem:[%s235 + $0x26] sm:$0xff]
                  %310 = vst [vmem:[%s236 + $0x24] sm:$0xff] %v309
                  %v311 = vld [vmem:[%s235 + $0x2e] sm:$0xff]
                  %312 = vst [vmem:[%s236 + $0x2c] sm:$0xff] %v311
                  %v313 = vld [vmem:[%s235 + $0x36] sm:$0xff]
                  %314 = vst [vmem:[%s236 + $0x34] sm:$0xff] %v313
                  %v315 = vld [vmem:[%s235 + $0x3e] sm:$0xff]
                  %316 = vst [vmem:[%s236 + $0x3c] sm:$0xff] %v315
                  %v317 = vld [vmem:[%s235 + $0x46] sm:$0xff]
                  %318 = vst [vmem:[%s236 + $0x44] sm:$0xff] %v317
                  %v319 = vld [vmem:[%s235 + $0x4e] sm:$0xff]
                  %320 = vst [vmem:[%s236 + $0x4c] sm:$0xff] %v319
                  %v321 = vld [vmem:[%s235 + $0x56] sm:$0xff]
                  %322 = vst [vmem:[%s236 + $0x54] sm:$0xff] %v321
                  %v323 = vld [vmem:[%s235 + $0x5e] sm:$0xff]
                  %324 = vst [vmem:[%s236 + $0x5c] sm:$0xff] %v323
                  %v325 = vld [vmem:[%s235 + $0x66] sm:$0xff]
                  %326 = vst [vmem:[%s236 + $0x64] sm:$0xff] %v325
                  %v327 = vld [vmem:[%s235 + $0x6e] sm:$0xff]
                  %328 = vst [vmem:[%s236 + $0x6c] sm:$0xff] %v327
                  %v329 = vld [vmem:[%s235 + $0x76] sm:$0xff]
                  %330 = vst [vmem:[%s236 + $0x74] sm:$0xff] %v329
                  %v331 = vld [vmem:[%s235 + $0x7e] sm:$0xff]
                  %332 = vst [vmem:[%s236 + $0x7c] sm:$0xff] %v331
                  %v333 = vld [vmem:[%s235 + $0x86] sm:$0xff]
                  %334 = vst [vmem:[%s236 + $0x84] sm:$0xff] %v333
                  %v335 = vld [vmem:[%s235 + $0x8e] sm:$0xff]
                  %336 = vst [vmem:[%s236 + $0x8c] sm:$0xff] %v335
                  %v337 = vld [vmem:[%s235 + $0x96] sm:$0xff]
                  %338 = vst [vmem:[%s236 + $0x94] sm:$0xff] %v337
                  %v339 = vld [vmem:[%s235 + $0x9e] sm:$0xff]
                  %340 = vst [vmem:[%s236 + $0x9c] sm:$0xff] %v339
                  %v341 = vld [vmem:[%s235 + $0xa6] sm:$0xff]
                  %342 = vst [vmem:[%s236 + $0xa4] sm:$0xff] %v341
                  %v343 = vld [vmem:[%s235 + $0xae] sm:$0xff]
                  %344 = vst [vmem:[%s236 + $0xac] sm:$0xff] %v343
                  %v345 = vld [vmem:[%s235 + $0xb6] sm:$0xff]
                  %346 = vst [vmem:[%s236 + $0xb4] sm:$0xff] %v345
                  %v347 = vld [vmem:[%s235 + $0xbe] sm:$0xff]
                  %348 = vst [vmem:[%s236 + $0xbc] sm:$0xff] %v347
                  %v349 = vld [vmem:[%s235 + $0xc6] sm:$0xff]
                  %350 = vst [vmem:[%s236 + $0xc4] sm:$0xff] %v349
                  %v351 = vld [vmem:[%s235 + $0xce] sm:$0xff]
                  %352 = vst [vmem:[%s236 + $0xcc] sm:$0xff] %v351
                  %v353 = vld [vmem:[%s235 + $0xd6] sm:$0xff]
                  %354 = vst [vmem:[%s236 + $0xd4] sm:$0xff] %v353
                  %v355 = vld [vmem:[%s235 + $0xde] sm:$0xff]
                  %356 = vst [vmem:[%s236 + $0xdc] sm:$0xff] %v355
                  %v357 = vld [vmem:[%s235 + $0xe6] sm:$0xff]
                  %358 = vst [vmem:[%s236 + $0xe4] sm:$0xff] %v357
                  %v359 = vld [vmem:[%s235 + $0xee] sm:$0xff]
                  %360 = vst [vmem:[%s236 + $0xec] sm:$0xff] %v359
                  %v361 = vld [vmem:[%s235 + $0xf6] sm:$0xff]
                  %362 = vst [vmem:[%s236 + $0xf4] sm:$0xff] %v361
                  %v363 = vld [vmem:[%s235 + $0xfe] sm:$0xff]
                  %364 = vst [vmem:[%s236 + $0xfc] sm:$0xff] %v363
                  %s365 = sadd.s32 1, %s234
                  %p366 = scmp.ge.s32.totalorder %s365, %s225
                  %s367 = scalar_select %p366, 0, %s365
                  %s368 = smul.u32 %s367, 256
                  %s369 = smul.u32 %s367, 256
                  %s370 = scalar_lea.vmem %s193, %s368
                  %s371 = scalar_lea.vmem %s183, %s369 [#allocation2]
                $region56: #{glu_conv2d.1} parent=50 // loop_footer
                  %s231 = sadd.s32 %s229, 1
                $region57: #{glu_conv2d.1} parent=50 // loop_footer_branch
                  %228 = sbr.rel target = $region53
                $region58: #{glu_conv2d.1} parent=50 // loop_exit
                  _
                %s372 = sshrl.u32 %s224, 5
                %s373 = sand.u32 %s224, 31
                %s374 = smul.u32 %s372, 32
                %s375 = smul.u32 128, %s374
                %s376 = sshra.s32 %s375, 4
                %s377 = scalar_lea.vmem %s193, %s376
                %s378 = smul.u32 128, %s374
                %s379 = sshra.s32 %s378, 4
                %s380 = scalar_lea.vmem %s183, %s379 [#allocation2]
                // While loop
                $region59: #{glu_conv2d.1} parent=50 // loop_pre_header
                  _
                $region60: #{glu_conv2d.1} parent=50 // loop_header
                  %s384 = sphi 0, %s386
                  %p385 = scmp.ge.s32.totalorder %s384, %s373
                  %s389 = sphi 0, %s398
                  %s390 = sphi %s377, %s401
                  %s391 = sphi %s380, %s402
                $region61: #{glu_conv2d.1} parent=50 // loop_header_branch
                  %388 = sbr.rel (%p385) target = $region65
                $region62: #{glu_conv2d.1} parent=50 // loop_body
                  %v392 = vld [vmem:[%s390] sm:$0xff]
                  %393 = vst [vmem:[%s391] sm:$0xff] %v392
                  %v394 = vld [vmem:[%s390 + $0x6] sm:$0xff]
                  %395 = vst [vmem:[%s391 + $0x4] sm:$0xff] %v394
                  %s396 = sadd.s32 1, %s389
                  %p397 = scmp.ge.s32.totalorder %s396, %s373
                  %s398 = scalar_select %p397, 0, %s396
                  %s399 = smul.u32 %s398, 8
                  %s400 = smul.u32 %s398, 8
                  %s401 = scalar_lea.vmem %s377, %s399
                  %s402 = scalar_lea.vmem %s380, %s400 [#allocation2]
                $region63: #{glu_conv2d.1} parent=50 // loop_footer
                  %s386 = sadd.s32 %s384, 1
                $region64: #{glu_conv2d.1} parent=50 // loop_footer_branch
                  %383 = sbr.rel target = $region60
                $region65: #{glu_conv2d.1} parent=50 // loop_exit
                  _
              $region51: #{glu_conv2d.1} parent=35 // pred_fallthru
                _
              %p403 = pneg %p220
              // Predicated region
              $region66: #{glu_conv2d.1} parent=35 // pred_check
                _
              $region67: #{glu_conv2d.1} parent=35 // pred_check_branch
                %405 = sbr.rel (%p220) target = $region69
              $region68: #{glu_conv2d.1} parent=35 // pred_region
                %s406 = sand.u32 %s194, 7
                %s407 = ssub.s32 %s194, %s406
                %s408 = scalar_lea.vmem %s193, %s407
                %s409 = ssub.s32 %s194, %s406
                %s410 = scalar_lea.vmem %s183, %s409 [#allocation2]
                %s411 = sshrl.u32 %s194, 3
                %s412 = sshrl.u32 %s411, 5
                // While loop
                $region70: #{glu_conv2d.1} parent=68 // loop_pre_header
                  _
                $region71: #{glu_conv2d.1} parent=68 // loop_header
                  %s416 = sphi 0, %s418
                  %p417 = scmp.ge.s32.totalorder %s416, %s412
                  %s421 = sphi 0, %s554
                  %s422 = sphi %s193, %s557
                  %s423 = sphi %s183, %s558
                $region72: #{glu_conv2d.1} parent=68 // loop_header_branch
                  %420 = sbr.rel (%p417) target = $region76
                $region73: #{glu_conv2d.1} parent=68 // loop_body
                  %v424 = vld [vmem:[%s422] sm:$0xff]
                  %425 = vst [vmem:[%s423] sm:$0xff] %v424
                  %v426 = vld [vmem:[%s422 + $0x8] sm:$0xff]
                  %427 = vst [vmem:[%s423 + $0x8] sm:$0xff] %v426
                  %v428 = vld [vmem:[%s422 + $0x10] sm:$0xff]
                  %429 = vst [vmem:[%s423 + $0x10] sm:$0xff] %v428
                  %v430 = vld [vmem:[%s422 + $0x18] sm:$0xff]
                  %431 = vst [vmem:[%s423 + $0x18] sm:$0xff] %v430
                  %v432 = vld [vmem:[%s422 + $0x20] sm:$0xff]
                  %433 = vst [vmem:[%s423 + $0x20] sm:$0xff] %v432
                  %v434 = vld [vmem:[%s422 + $0x28] sm:$0xff]
                  %435 = vst [vmem:[%s423 + $0x28] sm:$0xff] %v434
                  %v436 = vld [vmem:[%s422 + $0x30] sm:$0xff]
                  %437 = vst [vmem:[%s423 + $0x30] sm:$0xff] %v436
                  %v438 = vld [vmem:[%s422 + $0x38] sm:$0xff]
                  %439 = vst [vmem:[%s423 + $0x38] sm:$0xff] %v438
                  %v440 = vld [vmem:[%s422 + $0x40] sm:$0xff]
                  %441 = vst [vmem:[%s423 + $0x40] sm:$0xff] %v440
                  %v442 = vld [vmem:[%s422 + $0x48] sm:$0xff]
                  %443 = vst [vmem:[%s423 + $0x48] sm:$0xff] %v442
                  %v444 = vld [vmem:[%s422 + $0x50] sm:$0xff]
                  %445 = vst [vmem:[%s423 + $0x50] sm:$0xff] %v444
                  %v446 = vld [vmem:[%s422 + $0x58] sm:$0xff]
                  %447 = vst [vmem:[%s423 + $0x58] sm:$0xff] %v446
                  %v448 = vld [vmem:[%s422 + $0x60] sm:$0xff]
                  %449 = vst [vmem:[%s423 + $0x60] sm:$0xff] %v448
                  %v450 = vld [vmem:[%s422 + $0x68] sm:$0xff]
                  %451 = vst [vmem:[%s423 + $0x68] sm:$0xff] %v450
                  %v452 = vld [vmem:[%s422 + $0x70] sm:$0xff]
                  %453 = vst [vmem:[%s423 + $0x70] sm:$0xff] %v452
                  %v454 = vld [vmem:[%s422 + $0x78] sm:$0xff]
                  %455 = vst [vmem:[%s423 + $0x78] sm:$0xff] %v454
                  %v456 = vld [vmem:[%s422 + $0x80] sm:$0xff]
                  %457 = vst [vmem:[%s423 + $0x80] sm:$0xff] %v456
                  %v458 = vld [vmem:[%s422 + $0x88] sm:$0xff]
                  %459 = vst [vmem:[%s423 + $0x88] sm:$0xff] %v458
                  %v460 = vld [vmem:[%s422 + $0x90] sm:$0xff]
                  %461 = vst [vmem:[%s423 + $0x90] sm:$0xff] %v460
                  %v462 = vld [vmem:[%s422 + $0x98] sm:$0xff]
                  %463 = vst [vmem:[%s423 + $0x98] sm:$0xff] %v462
                  %v464 = vld [vmem:[%s422 + $0xa0] sm:$0xff]
                  %465 = vst [vmem:[%s423 + $0xa0] sm:$0xff] %v464
                  %v466 = vld [vmem:[%s422 + $0xa8] sm:$0xff]
                  %467 = vst [vmem:[%s423 + $0xa8] sm:$0xff] %v466
                  %v468 = vld [vmem:[%s422 + $0xb0] sm:$0xff]
                  %469 = vst [vmem:[%s423 + $0xb0] sm:$0xff] %v468
                  %v470 = vld [vmem:[%s422 + $0xb8] sm:$0xff]
                  %471 = vst [vmem:[%s423 + $0xb8] sm:$0xff] %v470
                  %v472 = vld [vmem:[%s422 + $0xc0] sm:$0xff]
                  %473 = vst [vmem:[%s423 + $0xc0] sm:$0xff] %v472
                  %v474 = vld [vmem:[%s422 + $0xc8] sm:$0xff]
                  %475 = vst [vmem:[%s423 + $0xc8] sm:$0xff] %v474
                  %v476 = vld [vmem:[%s422 + $0xd0] sm:$0xff]
                  %477 = vst [vmem:[%s423 + $0xd0] sm:$0xff] %v476
                  %v478 = vld [vmem:[%s422 + $0xd8] sm:$0xff]
                  %479 = vst [vmem:[%s423 + $0xd8] sm:$0xff] %v478
                  %v480 = vld [vmem:[%s422 + $0xe0] sm:$0xff]
                  %481 = vst [vmem:[%s423 + $0xe0] sm:$0xff] %v480
                  %v482 = vld [vmem:[%s422 + $0xe8] sm:$0xff]
                  %483 = vst [vmem:[%s423 + $0xe8] sm:$0xff] %v482
                  %v484 = vld [vmem:[%s422 + $0xf0] sm:$0xff]
                  %485 = vst [vmem:[%s423 + $0xf0] sm:$0xff] %v484
                  %v486 = vld [vmem:[%s422 + $0xf8] sm:$0xff]
                  %487 = vst [vmem:[%s423 + $0xf8] sm:$0xff] %v486
                  %v488 = vld [vmem:[%s422 + $0x6] sm:$0xff]
                  %489 = vst [vmem:[%s423 + $0x4] sm:$0xff] %v488
                  %v490 = vld [vmem:[%s422 + $0xe] sm:$0xff]
                  %491 = vst [vmem:[%s423 + $0xc] sm:$0xff] %v490
                  %v492 = vld [vmem:[%s422 + $0x16] sm:$0xff]
                  %493 = vst [vmem:[%s423 + $0x14] sm:$0xff] %v492
                  %v494 = vld [vmem:[%s422 + $0x1e] sm:$0xff]
                  %495 = vst [vmem:[%s423 + $0x1c] sm:$0xff] %v494
                  %v496 = vld [vmem:[%s422 + $0x26] sm:$0xff]
                  %497 = vst [vmem:[%s423 + $0x24] sm:$0xff] %v496
                  %v498 = vld [vmem:[%s422 + $0x2e] sm:$0xff]
                  %499 = vst [vmem:[%s423 + $0x2c] sm:$0xff] %v498
                  %v500 = vld [vmem:[%s422 + $0x36] sm:$0xff]
                  %501 = vst [vmem:[%s423 + $0x34] sm:$0xff] %v500
                  %v502 = vld [vmem:[%s422 + $0x3e] sm:$0xff]
                  %503 = vst [vmem:[%s423 + $0x3c] sm:$0xff] %v502
                  %v504 = vld [vmem:[%s422 + $0x46] sm:$0xff]
                  %505 = vst [vmem:[%s423 + $0x44] sm:$0xff] %v504
                  %v506 = vld [vmem:[%s422 + $0x4e] sm:$0xff]
                  %507 = vst [vmem:[%s423 + $0x4c] sm:$0xff] %v506
                  %v508 = vld [vmem:[%s422 + $0x56] sm:$0xff]
                  %509 = vst [vmem:[%s423 + $0x54] sm:$0xff] %v508
                  %v510 = vld [vmem:[%s422 + $0x5e] sm:$0xff]
                  %511 = vst [vmem:[%s423 + $0x5c] sm:$0xff] %v510
                  %v512 = vld [vmem:[%s422 + $0x66] sm:$0xff]
                  %513 = vst [vmem:[%s423 + $0x64] sm:$0xff] %v512
                  %v514 = vld [vmem:[%s422 + $0x6e] sm:$0xff]
                  %515 = vst [vmem:[%s423 + $0x6c] sm:$0xff] %v514
                  %v516 = vld [vmem:[%s422 + $0x76] sm:$0xff]
                  %517 = vst [vmem:[%s423 + $0x74] sm:$0xff] %v516
                  %v518 = vld [vmem:[%s422 + $0x7e] sm:$0xff]
                  %519 = vst [vmem:[%s423 + $0x7c] sm:$0xff] %v518
                  %v520 = vld [vmem:[%s422 + $0x86] sm:$0xff]
                  %521 = vst [vmem:[%s423 + $0x84] sm:$0xff] %v520
                  %v522 = vld [vmem:[%s422 + $0x8e] sm:$0xff]
                  %523 = vst [vmem:[%s423 + $0x8c] sm:$0xff] %v522
                  %v524 = vld [vmem:[%s422 + $0x96] sm:$0xff]
                  %525 = vst [vmem:[%s423 + $0x94] sm:$0xff] %v524
                  %v526 = vld [vmem:[%s422 + $0x9e] sm:$0xff]
                  %527 = vst [vmem:[%s423 + $0x9c] sm:$0xff] %v526
                  %v528 = vld [vmem:[%s422 + $0xa6] sm:$0xff]
                  %529 = vst [vmem:[%s423 + $0xa4] sm:$0xff] %v528
                  %v530 = vld [vmem:[%s422 + $0xae] sm:$0xff]
                  %531 = vst [vmem:[%s423 + $0xac] sm:$0xff] %v530
                  %v532 = vld [vmem:[%s422 + $0xb6] sm:$0xff]
                  %533 = vst [vmem:[%s423 + $0xb4] sm:$0xff] %v532
                  %v534 = vld [vmem:[%s422 + $0xbe] sm:$0xff]
                  %535 = vst [vmem:[%s423 + $0xbc] sm:$0xff] %v534
                  %v536 = vld [vmem:[%s422 + $0xc6] sm:$0xff]
                  %537 = vst [vmem:[%s423 + $0xc4] sm:$0xff] %v536
                  %v538 = vld [vmem:[%s422 + $0xce] sm:$0xff]
                  %539 = vst [vmem:[%s423 + $0xcc] sm:$0xff] %v538
                  %v540 = vld [vmem:[%s422 + $0xd6] sm:$0xff]
                  %541 = vst [vmem:[%s423 + $0xd4] sm:$0xff] %v540
                  %v542 = vld [vmem:[%s422 + $0xde] sm:$0xff]
                  %543 = vst [vmem:[%s423 + $0xdc] sm:$0xff] %v542
                  %v544 = vld [vmem:[%s422 + $0xe6] sm:$0xff]
                  %545 = vst [vmem:[%s423 + $0xe4] sm:$0xff] %v544
                  %v546 = vld [vmem:[%s422 + $0xee] sm:$0xff]
                  %547 = vst [vmem:[%s423 + $0xec] sm:$0xff] %v546
                  %v548 = vld [vmem:[%s422 + $0xf6] sm:$0xff]
                  %549 = vst [vmem:[%s423 + $0xf4] sm:$0xff] %v548
                  %v550 = vld [vmem:[%s422 + $0xfe] sm:$0xff]
                  %551 = vst [vmem:[%s423 + $0xfc] sm:$0xff] %v550
                  %s552 = sadd.s32 1, %s421
                  %p553 = scmp.ge.s32.totalorder %s552, %s412
                  %s554 = scalar_select %p553, 0, %s552
                  %s555 = smul.u32 %s554, 256
                  %s556 = smul.u32 %s554, 256
                  %s557 = scalar_lea.vmem %s193, %s555
                  %s558 = scalar_lea.vmem %s183, %s556 [#allocation2]
                $region74: #{glu_conv2d.1} parent=68 // loop_footer
                  %s418 = sadd.s32 %s416, 1
                $region75: #{glu_conv2d.1} parent=68 // loop_footer_branch
                  %415 = sbr.rel target = $region71
                $region76: #{glu_conv2d.1} parent=68 // loop_exit
                  _
                %s559 = sshrl.u32 %s411, 5
                %s560 = sand.u32 %s411, 31
                %s561 = smul.u32 %s559, 32
                %s562 = smul.u32 128, %s561
                %s563 = sshra.s32 %s562, 4
                %s564 = scalar_lea.vmem %s193, %s563
                %s565 = smul.u32 128, %s561
                %s566 = sshra.s32 %s565, 4
                %s567 = scalar_lea.vmem %s183, %s566 [#allocation2]
                // While loop
                $region77: #{glu_conv2d.1} parent=68 // loop_pre_header
                  _
                $region78: #{glu_conv2d.1} parent=68 // loop_header
                  %s571 = sphi 0, %s573
                  %p572 = scmp.ge.s32.totalorder %s571, %s560
                  %s576 = sphi 0, %s585
                  %s577 = sphi %s564, %s588
                  %s578 = sphi %s567, %s589
                $region79: #{glu_conv2d.1} parent=68 // loop_header_branch
                  %575 = sbr.rel (%p572) target = $region83
                $region80: #{glu_conv2d.1} parent=68 // loop_body
                  %v579 = vld [vmem:[%s577] sm:$0xff]
                  %580 = vst [vmem:[%s578] sm:$0xff] %v579
                  %v581 = vld [vmem:[%s577 + $0x6] sm:$0xff]
                  %582 = vst [vmem:[%s578 + $0x4] sm:$0xff] %v581
                  %s583 = sadd.s32 1, %s576
                  %p584 = scmp.ge.s32.totalorder %s583, %s560
                  %s585 = scalar_select %p584, 0, %s583
                  %s586 = smul.u32 %s585, 8
                  %s587 = smul.u32 %s585, 8
                  %s588 = scalar_lea.vmem %s564, %s586
                  %s589 = scalar_lea.vmem %s567, %s587 [#allocation2]
                $region81: #{glu_conv2d.1} parent=68 // loop_footer
                  %s573 = sadd.s32 %s571, 1
                $region82: #{glu_conv2d.1} parent=68 // loop_footer_branch
                  %570 = sbr.rel target = $region78
                $region83: #{glu_conv2d.1} parent=68 // loop_exit
                  _
                %s590 = sshll.u32 1, %s406
                %s591 = ssub.s32 %s590, 1
                loop: start=0, step=1, limit=1
                $region84: #{glu_conv2d.1} parent=68 // loop_pre_header
                  _
                $region85: #{glu_conv2d.1} parent=68 // loop_header
                  %s593 = sphi 0, %s597
                  %p594 = scmp.ge.s32.totalorder %s593, 1
                  %s598 = sphi %s408, %s408
                  %s599 = sphi %s410, %s410
                $region86: #{glu_conv2d.1} parent=68 // loop_header_branch
                  %596 = sbr.rel (%p594) target = $region90
                $region87: #{glu_conv2d.1} parent=68 // loop_body
                  %v600 = vld [vmem:[%s598] sm:%s591]
                  %601 = vst [vmem:[%s599] sm:%s591] %v600
                  %v602 = vld [vmem:[%s598 + $0x6] sm:%s591]
                  %603 = vst [vmem:[%s599 + $0x4] sm:%s591] %v602
                $region88: #{glu_conv2d.1} parent=68 // loop_footer
                  %s597 = sadd.s32 1, %s593
                $region89: #{glu_conv2d.1} parent=68 // loop_footer_branch
                  %592 = sbr.rel target = $region85
                $region90: #{glu_conv2d.1} parent=68 // loop_exit
                  _
              $region69: #{glu_conv2d.1} parent=35 // pred_fallthru
                _
            $region36: #{glu_conv2d.1} parent=31 // pred_fallthru
              _
            // Predicated region
            $region37: #{glu_conv2d.1} parent=31 // pred_check
              %p202 = pneg %p198
            $region38: #{glu_conv2d.1} parent=31 // pred_check_branch
              %204 = sbr.rel (%p202) target = $region40
            $region39: #{glu_conv2d.1} parent=31 // pred_region
              %s205 = sshll.u32 1, %s194
              %s206 = ssub.s32 %s205, 1
              loop: start=0, step=1, limit=1
              $region41: #{glu_conv2d.1} parent=39 // loop_pre_header
                _
              $region42: #{glu_conv2d.1} parent=39 // loop_header
                %s208 = sphi 0, %s212
                %p209 = scmp.ge.s32.totalorder %s208, 1
                %s213 = sphi %s193, %s193
                %s214 = sphi %s183, %s183
              $region43: #{glu_conv2d.1} parent=39 // loop_header_branch
                %211 = sbr.rel (%p209) target = $region47
              $region44: #{glu_conv2d.1} parent=39 // loop_body
                %v215 = vld [vmem:[%s213] sm:%s206]
                %216 = vst [vmem:[%s214] sm:%s206] %v215
                %v217 = vld [vmem:[%s213 + $0x6] sm:%s206]
                %218 = vst [vmem:[%s214 + $0x4] sm:%s206] %v217
              $region45: #{glu_conv2d.1} parent=39 // loop_footer
                %s212 = sadd.s32 1, %s208
              $region46: #{glu_conv2d.1} parent=39 // loop_footer_branch
                %207 = sbr.rel target = $region42
              $region47: #{glu_conv2d.1} parent=39 // loop_exit
                _
            $region40: #{glu_conv2d.1} parent=31 // pred_fallthru
              _
          $region32: #{glu_conv2d.1} parent=27 // pred_fallthru
            _
          %604 = vnop
        $region28: #{glu_conv2d.1} parent=23 // pred_fallthru
          _
        // Predicated region
        $region91: #{glu_conv2d.1} parent=23 // pred_check
          %p605 = pneg %p76
        $region92: #{glu_conv2d.1} parent=23 // pred_check_branch
          %607 = sbr.rel (%p605) target = $region94
        $region93: #{glu_conv2d.1} parent=23 // pred_region
          %s608 = sand.u32 %s66, 1
          %s609 = sand.u32 %s66, 1
          %s610 = smul.addr %s609, 4
          %s611 = scalar_lea.vmem [#allocation3], %s610
          %s612 = sadd.s32 %s18, 1
          %s613 = smul.u32 %s612, 2
          %s614 = smul.addr %s17, 6
          %s615 = sadd.s32 %s613, %s614
          %s616 = smul.addr %s615, 2
          %s617 = scalar_lea.vmem %s1, %s616
          // Predicated region
          $region95: #{glu_conv2d.1} parent=93 // pred_check
            _
          $region96: #{glu_conv2d.1} parent=93 // pred_check_branch
            %619 = sbr.rel (0) target = $region98
          $region97: #{glu_conv2d.1} parent=93 // pred_region
            // Predicated region
            $region99: #{glu_conv2d.1} parent=97 // pred_check
              _
            $region100: #{glu_conv2d.1} parent=97 // pred_check_branch
              %621 = sbr.rel target = $region102
            $region101: #{glu_conv2d.1} parent=97 // pred_region
              // Predicated region
              $region114: #{glu_conv2d.1} parent=101 // pred_check
                _
              $region115: #{glu_conv2d.1} parent=101 // pred_check_branch
                %639 = sbr.rel (0) target = $region117
              $region116: #{glu_conv2d.1} parent=101 // pred_region
                %s641 = ssub.s32 4, 1
                loop: start=0, step=1, limit=1
                $region118: #{glu_conv2d.1} parent=116 // loop_pre_header
                  _
                $region119: #{glu_conv2d.1} parent=116 // loop_header
                  %s643 = sphi 0, %s647
                  %p644 = scmp.ge.s32.totalorder %s643, 1
                  %s648 = sphi %s617, %s617
                  %s649 = sphi %s611, %s611
                $region120: #{glu_conv2d.1} parent=116 // loop_header_branch
                  %646 = sbr.rel (%p644) target = $region124
                $region121: #{glu_conv2d.1} parent=116 // loop_body
                  %v650 = vld [vmem:[%s648] sm:%s641]
                  %651 = vst [vmem:[%s649] sm:%s641] %v650
                  %v652 = vld [vmem:[%s648 + $0x6] sm:%s641]
                  %653 = vst [vmem:[%s649 + $0x2] sm:%s641] %v652
                $region122: #{glu_conv2d.1} parent=116 // loop_footer
                  %s647 = sadd.s32 1, %s643
                $region123: #{glu_conv2d.1} parent=116 // loop_footer_branch
                  %642 = sbr.rel target = $region119
                $region124: #{glu_conv2d.1} parent=116 // loop_exit
                  _
              $region117: #{glu_conv2d.1} parent=101 // pred_fallthru
                _
            $region102: #{glu_conv2d.1} parent=97 // pred_fallthru
              _
            // Predicated region
            $region103: #{glu_conv2d.1} parent=97 // pred_check
              _
            $region104: #{glu_conv2d.1} parent=97 // pred_check_branch
              %623 = sbr.rel (0) target = $region106
            $region105: #{glu_conv2d.1} parent=97 // pred_region
              %s625 = ssub.s32 4, 1
              loop: start=0, step=1, limit=1
              $region107: #{glu_conv2d.1} parent=105 // loop_pre_header
                _
              $region108: #{glu_conv2d.1} parent=105 // loop_header
                %s627 = sphi 0, %s631
                %p628 = scmp.ge.s32.totalorder %s627, 1
                %s632 = sphi %s617, %s617
                %s633 = sphi %s611, %s611
              $region109: #{glu_conv2d.1} parent=105 // loop_header_branch
                %630 = sbr.rel (%p628) target = $region113
              $region110: #{glu_conv2d.1} parent=105 // loop_body
                %v634 = vld [vmem:[%s632] sm:%s625]
                %635 = vst [vmem:[%s633] sm:%s625] %v634
                %v636 = vld [vmem:[%s632 + $0x6] sm:%s625]
                %637 = vst [vmem:[%s633 + $0x2] sm:%s625] %v636
              $region111: #{glu_conv2d.1} parent=105 // loop_footer
                %s631 = sadd.s32 1, %s627
              $region112: #{glu_conv2d.1} parent=105 // loop_footer_branch
                %626 = sbr.rel target = $region108
              $region113: #{glu_conv2d.1} parent=105 // loop_exit
                _
            $region106: #{glu_conv2d.1} parent=97 // pred_fallthru
              _
          $region98: #{glu_conv2d.1} parent=93 // pred_fallthru
            _
          %654 = vnop
        $region94: #{glu_conv2d.1} parent=23 // pred_fallthru
          _
      $region24: #{glu_conv2d.1} parent=5 // pred_fallthru
        _
      %p655 = scmp.le.s32.totalorder 1, %s10
      %p656 = scmp.lt.s32.totalorder %s10, 3
      %p657 = pnand %p655, %p656
      %p658 = pneg %p657
      // Predicated region
      $region125: #{glu_conv2d.1} parent=5 // pred_check
        _
      $region126: #{glu_conv2d.1} parent=5 // pred_check_branch
        %660 = sbr.rel (%p657) target = $region128
      $region127: #{glu_conv2d.1} parent=5 // pred_region
        %s661 = ssub.s32 %s10, 1
        %s662 = sand.u32 %s37, 1
        %s663 = sand.u32 %s37, 1
        %s664 = smul.addr %s663, 8
        %s665 = scalar_lea.vmem [#allocation2], %s664
        // Predicated region
        $region129: #{glu_conv2d.1} parent=127 // pred_check
          %p666 = pneg %p50
        $region130: #{glu_conv2d.1} parent=127 // pred_check_branch
          %668 = sbr.rel (%p666) target = $region132
        $region131: #{glu_conv2d.1} parent=127 // pred_region
          _
        $region132: #{glu_conv2d.1} parent=127 // pred_fallthru
          _
        %s669 = sand.u32 %s69, 1
        %s670 = sand.u32 %s69, 1
        %s671 = smul.addr %s670, 4
        %s672 = scalar_lea.vmem [#allocation3], %s671
        // Predicated region
        $region133: #{glu_conv2d.1} parent=127 // pred_check
          %p673 = pneg %p82
        $region134: #{glu_conv2d.1} parent=127 // pred_check_branch
          %675 = sbr.rel (%p673) target = $region136
        $region135: #{glu_conv2d.1} parent=127 // pred_region
          _
        $region136: #{glu_conv2d.1} parent=127 // pred_fallthru
          _
        %s676 = sand.u32 %s37, 1
        %s677 = sand.u32 %s37, 1
        %s678 = smul.addr %s677, 8
        %s679 = scalar_lea.vmem [#allocation2], %s678
        %p680 = pneg %p50
        %p681 = pneg %p47
        %s682 = sand.u32 %s69, 1
        %s683 = sand.u32 %s69, 1
        %s684 = smul.addr %s683, 4
        %s685 = scalar_lea.vmem [#allocation3], %s684
        %p686 = pneg %p82
        %p687 = pneg %p79
        %p688 = pneg %p103
        %p689 = pneg %p100
        %p690 = pneg %p124
        %p691 = pneg %p121
        %p692 = pneg %p152
        %p693 = pneg %p149
        %s694 = smul.u32 2, %s20
        %p695 = scmp.lt.s32.totalorder %s19, 1
        %s696 = scalar_select %p695, %s19, 1
        %p697 = scmp.lt.s32.totalorder %s694, 1
        %s698 = scalar_select %p697, %s694, 1
        %s699 = smul.addr %s696, 2
        %s700 = sadd.s32 %s698, %s699
        %s701 = smul.addr %s700, 8
        %s702 = scalar_lea.vmem %s4, %s701
        %s703 = smul.u32 2, %s20
        %s704 = ssub.s32 3, %s703
        %p705 = scmp.lt.s32.totalorder %s704, 2
        %s706 = scalar_select %p705, %s704, 2
        %s707 = smul.u32 64, %s706
        %s708 = sadd.s32 %s20, 1
        %s709 = smul.u32 %s708, 2
        %s710 = smul.u32 2, %s20
        %p711 = scmp.lt.s32.totalorder %s19, 1
        %s712 = scalar_select %p711, %s19, 1
        %p713 = scmp.lt.s32.totalorder %s710, 1
        %s714 = scalar_select %p713, %s710, 1
        %s715 = smul.addr %s712, 2
        %s716 = sadd.s32 %s714, %s715
        %s717 = smul.addr %s716, 8
        %s718 = scalar_lea.vmem %s4, %s717
        %s719 = smul.u32 2, %s20
        %v721 = vld [vmem:[%s665] sm:$0xf]
        %v722 = vld [vmem:[%s672] sm:$0x3]
        %v725 = vunpack.c.l.s4 1983009808
        %v726 = vunpack.c.0.s8 %v725
        %v727 = vlaneseq
        %v728 = vshrl.u32 %v727, 7
        %v729 = vsub.s32 %v726, %v728
        %v730 = vrot.slane %v721, %v729
        %v731 = vcombine.high %v730, %v730
        %s732 = scalar_lea.vmem %s665, 4 [#allocation2]
        %v733 = vld [vmem:[%s732] sm:$0xf]
        %s734 = scalar_lea.vmem %s672, 2 [#allocation3]
        %v735 = vld [vmem:[%s734] sm:$0x3]
        %v738 = vunpack.c.l.s4 1983009808
        %v739 = vunpack.c.0.s8 %v738
        %v740 = vlaneseq
        %v741 = vshrl.u32 %v740, 7
        %v742 = vsub.s32 %v739, %v741
        %v743 = vrot.slane %v733, %v742
        %v744 = vcombine.high %v743, %v743
        %v745 = vld [vmem:[%s3] sm:$0xff]
        %v746 = vld [vmem:[%s3 + $0x8] sm:$0xff]
        %748 = vset.pattern.permute.xlu0 0
        %749 = vperm.xlu0 %748, %v745
        %v750 = vpop.permute.xlu0 %749
        %753 = vset.pattern.permute.xlu0 0
        %754 = vperm.xlu0 %753, %v746
        %v755 = vpop.permute.xlu0 %754
        %v757 = vld [vmem:[%s2] sm:$0xf]
        %v758 = vld [vmem:[%s2 + $0x4] sm:$0xf]
        %v761 = vunpack.c.l.b16 %v757
        %v762 = vunpack.c.l.b16 %v758
        %v763 = vpack.c.b16 %v762, %v761
        %vm764 = vcmask 31744
        %v766 = vsel %vm764, %v763, 0
        %vm768 = vcmask 1041408
        %v770 = vsel %vm768, %v730, 0
        %v773 = vsel %vm768, %v731, 0
        %775 = vmatprep.subr.bf16.mxu0 0
        %776 = vmatpush1.bf16.msra.mxu0 0
        %777 = vmatprep.subr.bf16.mxu0 0
        %778 = vmatpush1.bf16.msra.mxu0 0
        %779 = vmatprep.subr.bf16.mxu0 0
        %780 = vmatpush1.bf16.msra.mxu0 0
        %781 = vmatprep.subr.bf16.mxu0 0
        %782 = vmatpush1.bf16.msra.mxu0 0
        %783 = vmatprep.subr.bf16.mxu0 0
        %784 = vmatpush1.bf16.msra.mxu0 0
        %785 = vmatprep.subr.bf16.mxu0 0
        %786 = vmatpush1.bf16.msra.mxu0 0
        %787 = vmatprep.subr.bf16.mxu0 0
        %788 = vmatpush1.bf16.msra.mxu0 0
        %789 = vmatprep.subr.bf16.mxu0 %v773
        %790 = vmatpush1.bf16.msra.mxu0 %v770
        %791 = vmatprep.subr.bf16.mxu0 0
        %792 = vmatpush2.bf16.msra.mxu0 0
        %793 = vmatprep.subr.bf16.mxu0 0
        %794 = vmatpush2.bf16.msra.mxu0 0
        %795 = vmatprep.subr.bf16.mxu0 0
        %796 = vmatpush2.bf16.msra.mxu0 0
        %797 = vmatprep.subr.bf16.mxu0 0
        %798 = vmatpush2.bf16.msra.mxu0 0
        %799 = vmatprep.subr.bf16.mxu0 0
        %800 = vmatpush2.bf16.msra.mxu0 0
        %801 = vmatprep.subr.bf16.mxu0 0
        %802 = vmatpush2.bf16.msra.mxu0 0
        %803 = vmatprep.subr.bf16.mxu0 0
        %804 = vmatpush2.bf16.msra.mxu0 0
        %805 = vmatprep.subr.bf16.mxu0 0
        %806 = vmatpush2.bf16.msra.mxu0 0
        %807 = vmatprep.mubr.bf16.mxu0 0
        %808 = vmatmul.mubr.bf16.gmra.mxu0 %v766
        %v809 = vpop.f32.mrf.mxu0
        %v810 = vadd.f32 0.0, %v809
        %v811 = vpop.f32.mrf.mxu0
        %v812 = vadd.f32 0.0, %v811
        %v813 = vpop.f32.mrf.mxu0
        %v814 = vadd.f32 0.0, %v813
        %v815 = vpop.f32.mrf.mxu0
        %v816 = vadd.f32 0.0, %v815
        %817 = vdwg.mxu0
        %v818 = vadd.f32 %v750, %v810
        %v819 = vadd.f32 %v750, %v812
        %v820 = vadd.f32 %v755, %v814
        %v821 = vadd.f32 %v755, %v816
        %s822 = scalar_lea.vmem %s2, 8
        %v823 = vld [vmem:[%s822] sm:$0xf]
        %v824 = vld [vmem:[%s822 + $0x4] sm:$0xf]
        %v827 = vunpack.c.l.b16 %v823
        %v828 = vunpack.c.l.b16 %v824
        %v829 = vpack.c.b16 %v828, %v827
        %v831 = vsel %vm764, %v829, 0
        %v834 = vsel %vm768, %v743, 0
        %v837 = vsel %vm768, %v744, 0
        %839 = vmatprep.subr.bf16.mxu0 0
        %840 = vmatpush1.bf16.msra.mxu0 0
        %841 = vmatprep.subr.bf16.mxu0 0
        %842 = vmatpush1.bf16.msra.mxu0 0
        %843 = vmatprep.subr.bf16.mxu0 0
        %844 = vmatpush1.bf16.msra.mxu0 0
        %845 = vmatprep.subr.bf16.mxu0 0
        %846 = vmatpush1.bf16.msra.mxu0 0
        %847 = vmatprep.subr.bf16.mxu0 0
        %848 = vmatpush1.bf16.msra.mxu0 0
        %849 = vmatprep.subr.bf16.mxu0 0
        %850 = vmatpush1.bf16.msra.mxu0 0
        %851 = vmatprep.subr.bf16.mxu0 0
        %852 = vmatpush1.bf16.msra.mxu0 0
        %853 = vmatprep.subr.bf16.mxu0 %v837
        %854 = vmatpush1.bf16.msra.mxu0 %v834
        %855 = vmatprep.subr.bf16.mxu0 0
        %856 = vmatpush2.bf16.msra.mxu0 0
        %857 = vmatprep.subr.bf16.mxu0 0
        %858 = vmatpush2.bf16.msra.mxu0 0
        %859 = vmatprep.subr.bf16.mxu0 0
        %860 = vmatpush2.bf16.msra.mxu0 0
        %861 = vmatprep.subr.bf16.mxu0 0
        %862 = vmatpush2.bf16.msra.mxu0 0
        %863 = vmatprep.subr.bf16.mxu0 0
        %864 = vmatpush2.bf16.msra.mxu0 0
        %865 = vmatprep.subr.bf16.mxu0 0
        %866 = vmatpush2.bf16.msra.mxu0 0
        %867 = vmatprep.subr.bf16.mxu0 0
        %868 = vmatpush2.bf16.msra.mxu0 0
        %869 = vmatprep.subr.bf16.mxu0 0
        %870 = vmatpush2.bf16.msra.mxu0 0
        %871 = vmatprep.mubr.bf16.mxu0 0
        %872 = vmatmul.mubr.bf16.gmra.mxu0 %v831
        %v873 = vpop.f32.mrf.mxu0
        %v874 = vadd.f32 0.0, %v873
        %v875 = vpop.f32.mrf.mxu0
        %v876 = vadd.f32 0.0, %v875
        %v877 = vpop.f32.mrf.mxu0
        %v878 = vadd.f32 0.0, %v877
        %v879 = vpop.f32.mrf.mxu0
        %v880 = vadd.f32 0.0, %v879
        %881 = vdwg.mxu0
        %v882 = vadd.f32 %v818, %v874
        %v883 = vadd.f32 %v819, %v876
        %v884 = vadd.f32 %v820, %v878
        %v885 = vadd.f32 %v821, %v880
        %s886 = scalar_lea.vmem %s2, 16
        %v887 = vld [vmem:[%s886] sm:$0xf]
        %v888 = vld [vmem:[%s886 + $0x4] sm:$0xf]
        %v891 = vunpack.c.l.b16 %v887
        %v892 = vunpack.c.l.b16 %v888
        %v893 = vpack.c.b16 %v892, %v891
        %895 = vrot.lane.b32.xlu0 %v730, 127
        %v896 = vpop.permute.xlu0 %895
        %897 = vrot.lane.b32.xlu0 %v731, 127
        %v898 = vpop.permute.xlu0 %897
        %899 = vrot.lane.b32.xlu0 %v722, 127
        %v900 = vpop.permute.xlu0 %899
        %vm901 = vcmask 1039360
        %v902 = vsel %vm901, %v896, %v898
        %v903 = vsel %vm901, %v898, %v900
        %v905 = vsel %vm764, %v893, 0
        %v908 = vsel %vm768, %v902, 0
        %v911 = vsel %vm768, %v903, 0
        %913 = vmatprep.subr.bf16.mxu0 0
        %914 = vmatpush1.bf16.msra.mxu0 0
        %915 = vmatprep.subr.bf16.mxu0 0
        %916 = vmatpush1.bf16.msra.mxu0 0
        %917 = vmatprep.subr.bf16.mxu0 0
        %918 = vmatpush1.bf16.msra.mxu0 0
        %919 = vmatprep.subr.bf16.mxu0 0
        %920 = vmatpush1.bf16.msra.mxu0 0
        %921 = vmatprep.subr.bf16.mxu0 0
        %922 = vmatpush1.bf16.msra.mxu0 0
        %923 = vmatprep.subr.bf16.mxu0 0
        %924 = vmatpush1.bf16.msra.mxu0 0
        %925 = vmatprep.subr.bf16.mxu0 0
        %926 = vmatpush1.bf16.msra.mxu0 0
        %927 = vmatprep.subr.bf16.mxu0 %v911
        %928 = vmatpush1.bf16.msra.mxu0 %v908
        %929 = vmatprep.subr.bf16.mxu0 0
        %930 = vmatpush2.bf16.msra.mxu0 0
        %931 = vmatprep.subr.bf16.mxu0 0
        %932 = vmatpush2.bf16.msra.mxu0 0
        %933 = vmatprep.subr.bf16.mxu0 0
        %934 = vmatpush2.bf16.msra.mxu0 0
        %935 = vmatprep.subr.bf16.mxu0 0
        %936 = vmatpush2.bf16.msra.mxu0 0
        %937 = vmatprep.subr.bf16.mxu0 0
        %938 = vmatpush2.bf16.msra.mxu0 0
        %939 = vmatprep.subr.bf16.mxu0 0
        %940 = vmatpush2.bf16.msra.mxu0 0
        %941 = vmatprep.subr.bf16.mxu0 0
        %942 = vmatpush2.bf16.msra.mxu0 0
        %943 = vmatprep.subr.bf16.mxu0 0
        %944 = vmatpush2.bf16.msra.mxu0 0
        %945 = vmatprep.mubr.bf16.mxu0 0
        %946 = vmatmul.mubr.bf16.gmra.mxu0 %v905
        %v947 = vpop.f32.mrf.mxu0
        %v948 = vadd.f32 0.0, %v947
        %v949 = vpop.f32.mrf.mxu0
        %v950 = vadd.f32 0.0, %v949
        %v951 = vpop.f32.mrf.mxu0
        %v952 = vadd.f32 0.0, %v951
        %v953 = vpop.f32.mrf.mxu0
        %v954 = vadd.f32 0.0, %v953
        %955 = vdwg.mxu0
        %v956 = vadd.f32 %v882, %v948
        %v957 = vadd.f32 %v883, %v950
        %v958 = vadd.f32 %v884, %v952
        %v959 = vadd.f32 %v885, %v954
        %s960 = scalar_lea.vmem %s2, 24
        %v961 = vld [vmem:[%s960] sm:$0xf]
        %v962 = vld [vmem:[%s960 + $0x4] sm:$0xf]
        %v965 = vunpack.c.l.b16 %v961
        %v966 = vunpack.c.l.b16 %v962
        %v967 = vpack.c.b16 %v966, %v965
        %968 = vrot.lane.b32.xlu0 %v730, 119
        %v969 = vpop.permute.xlu0 %968
        %970 = vrot.lane.b32.xlu0 %v731, 119
        %v971 = vpop.permute.xlu0 %970
        %972 = vrot.lane.b32.xlu0 %v722, 119
        %v973 = vpop.permute.xlu0 %972
        %vm974 = vcmask 973824
        %v975 = vsel %vm974, %v969, %v971
        %v976 = vsel %vm974, %v971, %v973
        %v978 = vsel %vm764, %v967, 0
        %v981 = vsel %vm768, %v975, 0
        %v984 = vsel %vm768, %v976, 0
        %986 = vmatprep.subr.bf16.mxu0 0
        %987 = vmatpush1.bf16.msra.mxu0 0
        %988 = vmatprep.subr.bf16.mxu0 0
        %989 = vmatpush1.bf16.msra.mxu0 0
        %990 = vmatprep.subr.bf16.mxu0 0
        %991 = vmatpush1.bf16.msra.mxu0 0
        %992 = vmatprep.subr.bf16.mxu0 0
        %993 = vmatpush1.bf16.msra.mxu0 0
        %994 = vmatprep.subr.bf16.mxu0 0
        %995 = vmatpush1.bf16.msra.mxu0 0
        %996 = vmatprep.subr.bf16.mxu0 0
        %997 = vmatpush1.bf16.msra.mxu0 0
        %998 = vmatprep.subr.bf16.mxu0 0
        %999 = vmatpush1.bf16.msra.mxu0 0
        %1000 = vmatprep.subr.bf16.mxu0 %v984
        %1001 = vmatpush1.bf16.msra.mxu0 %v981
        %1002 = vmatprep.subr.bf16.mxu0 0
        %1003 = vmatpush2.bf16.msra.mxu0 0
        %1004 = vmatprep.subr.bf16.mxu0 0
        %1005 = vmatpush2.bf16.msra.mxu0 0
        %1006 = vmatprep.subr.bf16.mxu0 0
        %1007 = vmatpush2.bf16.msra.mxu0 0
        %1008 = vmatprep.subr.bf16.mxu0 0
        %1009 = vmatpush2.bf16.msra.mxu0 0
        %1010 = vmatprep.subr.bf16.mxu0 0
        %1011 = vmatpush2.bf16.msra.mxu0 0
        %1012 = vmatprep.subr.bf16.mxu0 0
        %1013 = vmatpush2.bf16.msra.mxu0 0
        %1014 = vmatprep.subr.bf16.mxu0 0
        %1015 = vmatpush2.bf16.msra.mxu0 0
        %1016 = vmatprep.subr.bf16.mxu0 0
        %1017 = vmatpush2.bf16.msra.mxu0 0
        %1018 = vmatprep.mubr.bf16.mxu0 0
        %1019 = vmatmul.mubr.bf16.gmra.mxu0 %v978
        %v1020 = vpop.f32.mrf.mxu0
        %v1021 = vadd.f32 0.0, %v1020
        %v1022 = vpop.f32.mrf.mxu0
        %v1023 = vadd.f32 0.0, %v1022
        %v1024 = vpop.f32.mrf.mxu0
        %v1025 = vadd.f32 0.0, %v1024
        %v1026 = vpop.f32.mrf.mxu0
        %v1027 = vadd.f32 0.0, %v1026
        %1028 = vdwg.mxu0
        %v1029 = vadd.f32 %v956, %v1021
        %v1030 = vadd.f32 %v957, %v1023
        %v1031 = vadd.f32 %v958, %v1025
        %v1032 = vadd.f32 %v959, %v1027
        %s1033 = scalar_lea.vmem %s2, 32
        %v1034 = vld [vmem:[%s1033] sm:$0xf]
        %v1035 = vld [vmem:[%s1033 + $0x4] sm:$0xf]
        %v1038 = vunpack.c.l.b16 %v1034
        %v1039 = vunpack.c.l.b16 %v1035
        %v1040 = vpack.c.b16 %v1039, %v1038
        %1042 = vrot.lane.b32.xlu0 %v743, 119
        %v1043 = vpop.permute.xlu0 %1042
        %1044 = vrot.lane.b32.xlu0 %v744, 119
        %v1045 = vpop.permute.xlu0 %1044
        %1046 = vrot.lane.b32.xlu0 %v735, 119
        %v1047 = vpop.permute.xlu0 %1046
        %v1048 = vsel %vm974, %v1043, %v1045
        %v1049 = vsel %vm974, %v1045, %v1047
        %v1051 = vsel %vm764, %v1040, 0
        %v1054 = vsel %vm768, %v1048, 0
        %v1057 = vsel %vm768, %v1049, 0
        %1059 = vmatprep.subr.bf16.mxu0 0
        %1060 = vmatpush1.bf16.msra.mxu0 0
        %1061 = vmatprep.subr.bf16.mxu0 0
        %1062 = vmatpush1.bf16.msra.mxu0 0
        %1063 = vmatprep.subr.bf16.mxu0 0
        %1064 = vmatpush1.bf16.msra.mxu0 0
        %1065 = vmatprep.subr.bf16.mxu0 0
        %1066 = vmatpush1.bf16.msra.mxu0 0
        %1067 = vmatprep.subr.bf16.mxu0 0
        %1068 = vmatpush1.bf16.msra.mxu0 0
        %1069 = vmatprep.subr.bf16.mxu0 0
        %1070 = vmatpush1.bf16.msra.mxu0 0
        %1071 = vmatprep.subr.bf16.mxu0 0
        %1072 = vmatpush1.bf16.msra.mxu0 0
        %1073 = vmatprep.subr.bf16.mxu0 %v1057
        %1074 = vmatpush1.bf16.msra.mxu0 %v1054
        %1075 = vmatprep.subr.bf16.mxu0 0
        %1076 = vmatpush2.bf16.msra.mxu0 0
        %1077 = vmatprep.subr.bf16.mxu0 0
        %1078 = vmatpush2.bf16.msra.mxu0 0
        %1079 = vmatprep.subr.bf16.mxu0 0
        %1080 = vmatpush2.bf16.msra.mxu0 0
        %1081 = vmatprep.subr.bf16.mxu0 0
        %1082 = vmatpush2.bf16.msra.mxu0 0
        %1083 = vmatprep.subr.bf16.mxu0 0
        %1084 = vmatpush2.bf16.msra.mxu0 0
        %1085 = vmatprep.subr.bf16.mxu0 0
        %1086 = vmatpush2.bf16.msra.mxu0 0
        %1087 = vmatprep.subr.bf16.mxu0 0
        %1088 = vmatpush2.bf16.msra.mxu0 0
        %1089 = vmatprep.subr.bf16.mxu0 0
        %1090 = vmatpush2.bf16.msra.mxu0 0
        %1091 = vmatprep.mubr.bf16.mxu0 0
        %1092 = vmatmul.mubr.bf16.gmra.mxu0 %v1051
        %v1093 = vpop.f32.mrf.mxu0
        %v1094 = vadd.f32 0.0, %v1093
        %v1095 = vpop.f32.mrf.mxu0
        %v1096 = vadd.f32 0.0, %v1095
        %v1097 = vpop.f32.mrf.mxu0
        %v1098 = vadd.f32 0.0, %v1097
        %v1099 = vpop.f32.mrf.mxu0
        %v1100 = vadd.f32 0.0, %v1099
        %1101 = vdwg.mxu0
        %v1102 = vadd.f32 %v1029, %v1094
        %v1103 = vadd.f32 %v1030, %v1096
        %v1104 = vadd.f32 %v1031, %v1098
        %v1105 = vadd.f32 %v1032, %v1100
        %s1106 = scalar_lea.vmem %s2, 40
        %v1107 = vld [vmem:[%s1106] sm:$0xf]
        %v1108 = vld [vmem:[%s1106 + $0x4] sm:$0xf]
        %v1111 = vunpack.c.l.b16 %v1107
        %v1112 = vunpack.c.l.b16 %v1108
        %v1113 = vpack.c.b16 %v1112, %v1111
        %1114 = vrot.lane.b32.xlu0 %v730, 118
        %v1115 = vpop.permute.xlu0 %1114
        %1116 = vrot.lane.b32.xlu0 %v731, 118
        %v1117 = vpop.permute.xlu0 %1116
        %1118 = vrot.lane.b32.xlu0 %v722, 118
        %v1119 = vpop.permute.xlu0 %1118
        %vm1120 = vcmask 965632
        %v1121 = vsel %vm1120, %v1115, %v1117
        %v1122 = vsel %vm1120, %v1117, %v1119
        %v1124 = vsel %vm764, %v1113, 0
        %v1127 = vsel %vm768, %v1121, 0
        %v1130 = vsel %vm768, %v1122, 0
        %1132 = vmatprep.subr.bf16.mxu0 0
        %1133 = vmatpush1.bf16.msra.mxu0 0
        %1134 = vmatprep.subr.bf16.mxu0 0
        %1135 = vmatpush1.bf16.msra.mxu0 0
        %1136 = vmatprep.subr.bf16.mxu0 0
        %1137 = vmatpush1.bf16.msra.mxu0 0
        %1138 = vmatprep.subr.bf16.mxu0 0
        %1139 = vmatpush1.bf16.msra.mxu0 0
        %1140 = vmatprep.subr.bf16.mxu0 0
        %1141 = vmatpush1.bf16.msra.mxu0 0
        %1142 = vmatprep.subr.bf16.mxu0 0
        %1143 = vmatpush1.bf16.msra.mxu0 0
        %1144 = vmatprep.subr.bf16.mxu0 0
        %1145 = vmatpush1.bf16.msra.mxu0 0
        %1146 = vmatprep.subr.bf16.mxu0 %v1130
        %1147 = vmatpush1.bf16.msra.mxu0 %v1127
        %1148 = vmatprep.subr.bf16.mxu0 0
        %1149 = vmatpush2.bf16.msra.mxu0 0
        %1150 = vmatprep.subr.bf16.mxu0 0
        %1151 = vmatpush2.bf16.msra.mxu0 0
        %1152 = vmatprep.subr.bf16.mxu0 0
        %1153 = vmatpush2.bf16.msra.mxu0 0
        %1154 = vmatprep.subr.bf16.mxu0 0
        %1155 = vmatpush2.bf16.msra.mxu0 0
        %1156 = vmatprep.subr.bf16.mxu0 0
        %1157 = vmatpush2.bf16.msra.mxu0 0
        %1158 = vmatprep.subr.bf16.mxu0 0
        %1159 = vmatpush2.bf16.msra.mxu0 0
        %1160 = vmatprep.subr.bf16.mxu0 0
        %1161 = vmatpush2.bf16.msra.mxu0 0
        %1162 = vmatprep.subr.bf16.mxu0 0
        %1163 = vmatpush2.bf16.msra.mxu0 0
        %1164 = vmatprep.mubr.bf16.mxu0 0
        %1165 = vmatmul.mubr.bf16.gmra.mxu0 %v1124
        %v1166 = vpop.f32.mrf.mxu0
        %v1167 = vadd.f32 0.0, %v1166
        %v1168 = vpop.f32.mrf.mxu0
        %v1169 = vadd.f32 0.0, %v1168
        %v1170 = vpop.f32.mrf.mxu0
        %v1171 = vadd.f32 0.0, %v1170
        %v1172 = vpop.f32.mrf.mxu0
        %v1173 = vadd.f32 0.0, %v1172
        %1174 = vdwg.mxu0
        %v1175 = vadd.f32 %v1102, %v1167
        %v1176 = vadd.f32 %v1103, %v1169
        %v1177 = vadd.f32 %v1104, %v1171
        %v1178 = vadd.f32 %v1105, %v1173
        %s1179 = scalar_lea.vmem %s2, 48
        %v1180 = vld [vmem:[%s1179] sm:$0xf]
        %v1181 = vld [vmem:[%s1179 + $0x4] sm:$0xf]
        %v1184 = vunpack.c.l.b16 %v1180
        %v1185 = vunpack.c.l.b16 %v1181
        %v1186 = vpack.c.b16 %v1185, %v1184
        %1187 = vrot.lane.b32.xlu0 %v730, 110
        %v1188 = vpop.permute.xlu0 %1187
        %1189 = vrot.lane.b32.xlu0 %v731, 110
        %v1190 = vpop.permute.xlu0 %1189
        %1191 = vrot.lane.b32.xlu0 %v722, 110
        %v1192 = vpop.permute.xlu0 %1191
        %vm1193 = vcmask 900096
        %v1194 = vsel %vm1193, %v1188, %v1190
        %v1195 = vsel %vm1193, %v1190, %v1192
        %v1197 = vsel %vm764, %v1186, 0
        %v1200 = vsel %vm768, %v1194, 0
        %v1203 = vsel %vm768, %v1195, 0
        %1205 = vmatprep.subr.bf16.mxu0 0
        %1206 = vmatpush1.bf16.msra.mxu0 0
        %1207 = vmatprep.subr.bf16.mxu0 0
        %1208 = vmatpush1.bf16.msra.mxu0 0
        %1209 = vmatprep.subr.bf16.mxu0 0
        %1210 = vmatpush1.bf16.msra.mxu0 0
        %1211 = vmatprep.subr.bf16.mxu0 0
        %1212 = vmatpush1.bf16.msra.mxu0 0
        %1213 = vmatprep.subr.bf16.mxu0 0
        %1214 = vmatpush1.bf16.msra.mxu0 0
        %1215 = vmatprep.subr.bf16.mxu0 0
        %1216 = vmatpush1.bf16.msra.mxu0 0
        %1217 = vmatprep.subr.bf16.mxu0 0
        %1218 = vmatpush1.bf16.msra.mxu0 0
        %1219 = vmatprep.subr.bf16.mxu0 %v1203
        %1220 = vmatpush1.bf16.msra.mxu0 %v1200
        %1221 = vmatprep.subr.bf16.mxu0 0
        %1222 = vmatpush2.bf16.msra.mxu0 0
        %1223 = vmatprep.subr.bf16.mxu0 0
        %1224 = vmatpush2.bf16.msra.mxu0 0
        %1225 = vmatprep.subr.bf16.mxu0 0
        %1226 = vmatpush2.bf16.msra.mxu0 0
        %1227 = vmatprep.subr.bf16.mxu0 0
        %1228 = vmatpush2.bf16.msra.mxu0 0
        %1229 = vmatprep.subr.bf16.mxu0 0
        %1230 = vmatpush2.bf16.msra.mxu0 0
        %1231 = vmatprep.subr.bf16.mxu0 0
        %1232 = vmatpush2.bf16.msra.mxu0 0
        %1233 = vmatprep.subr.bf16.mxu0 0
        %1234 = vmatpush2.bf16.msra.mxu0 0
        %1235 = vmatprep.subr.bf16.mxu0 0
        %1236 = vmatpush2.bf16.msra.mxu0 0
        %1237 = vmatprep.mubr.bf16.mxu0 0
        %1238 = vmatmul.mubr.bf16.gmra.mxu0 %v1197
        %v1239 = vpop.f32.mrf.mxu0
        %v1240 = vadd.f32 0.0, %v1239
        %v1241 = vpop.f32.mrf.mxu0
        %v1242 = vadd.f32 0.0, %v1241
        %v1243 = vpop.f32.mrf.mxu0
        %v1244 = vadd.f32 0.0, %v1243
        %v1245 = vpop.f32.mrf.mxu0
        %v1246 = vadd.f32 0.0, %v1245
        %1247 = vdwg.mxu0
        %v1248 = vadd.f32 %v1175, %v1240
        %v1249 = vadd.f32 %v1176, %v1242
        %v1250 = vadd.f32 %v1177, %v1244
        %v1251 = vadd.f32 %v1178, %v1246
        %s1252 = scalar_lea.vmem %s2, 56
        %v1253 = vld [vmem:[%s1252] sm:$0xf]
        %v1254 = vld [vmem:[%s1252 + $0x4] sm:$0xf]
        %v1257 = vunpack.c.l.b16 %v1253
        %v1258 = vunpack.c.l.b16 %v1254
        %v1259 = vpack.c.b16 %v1258, %v1257
        %1260 = vrot.lane.b32.xlu0 %v743, 110
        %v1261 = vpop.permute.xlu0 %1260
        %1262 = vrot.lane.b32.xlu0 %v744, 110
        %v1263 = vpop.permute.xlu0 %1262
        %1264 = vrot.lane.b32.xlu0 %v735, 110
        %v1265 = vpop.permute.xlu0 %1264
        %v1266 = vsel %vm1193, %v1261, %v1263
        %v1267 = vsel %vm1193, %v1263, %v1265
        %v1269 = vsel %vm764, %v1259, 0
        %v1272 = vsel %vm768, %v1266, 0
        %v1275 = vsel %vm768, %v1267, 0
        %1277 = vmatprep.subr.bf16.mxu0 0
        %1278 = vmatpush1.bf16.msra.mxu0 0
        %1279 = vmatprep.subr.bf16.mxu0 0
        %1280 = vmatpush1.bf16.msra.mxu0 0
        %1281 = vmatprep.subr.bf16.mxu0 0
        %1282 = vmatpush1.bf16.msra.mxu0 0
        %1283 = vmatprep.subr.bf16.mxu0 0
        %1284 = vmatpush1.bf16.msra.mxu0 0
        %1285 = vmatprep.subr.bf16.mxu0 0
        %1286 = vmatpush1.bf16.msra.mxu0 0
        %1287 = vmatprep.subr.bf16.mxu0 0
        %1288 = vmatpush1.bf16.msra.mxu0 0
        %1289 = vmatprep.subr.bf16.mxu0 0
        %1290 = vmatpush1.bf16.msra.mxu0 0
        %1291 = vmatprep.subr.bf16.mxu0 %v1275
        %1292 = vmatpush1.bf16.msra.mxu0 %v1272
        %1293 = vmatprep.subr.bf16.mxu0 0
        %1294 = vmatpush2.bf16.msra.mxu0 0
        %1295 = vmatprep.subr.bf16.mxu0 0
        %1296 = vmatpush2.bf16.msra.mxu0 0
        %1297 = vmatprep.subr.bf16.mxu0 0
        %1298 = vmatpush2.bf16.msra.mxu0 0
        %1299 = vmatprep.subr.bf16.mxu0 0
        %1300 = vmatpush2.bf16.msra.mxu0 0
        %1301 = vmatprep.subr.bf16.mxu0 0
        %1302 = vmatpush2.bf16.msra.mxu0 0
        %1303 = vmatprep.subr.bf16.mxu0 0
        %1304 = vmatpush2.bf16.msra.mxu0 0
        %1305 = vmatprep.subr.bf16.mxu0 0
        %1306 = vmatpush2.bf16.msra.mxu0 0
        %1307 = vmatprep.subr.bf16.mxu0 0
        %1308 = vmatpush2.bf16.msra.mxu0 0
        %1309 = vmatprep.mubr.bf16.mxu0 0
        %1310 = vmatmul.mubr.bf16.gmra.mxu0 %v1269
        %v1311 = vpop.f32.mrf.mxu0
        %v1312 = vadd.f32 0.0, %v1311
        %v1313 = vpop.f32.mrf.mxu0
        %v1314 = vadd.f32 0.0, %v1313
        %v1315 = vpop.f32.mrf.mxu0
        %v1316 = vadd.f32 0.0, %v1315
        %v1317 = vpop.f32.mrf.mxu0
        %v1318 = vadd.f32 0.0, %v1317
        %1319 = vdwg.mxu0
        %v1320 = vadd.f32 %v1248, %v1312
        %v1321 = vadd.f32 %v1249, %v1314
        %v1322 = vadd.f32 %v1250, %v1316
        %v1323 = vadd.f32 %v1251, %v1318
        %s1324 = scalar_lea.vmem %s2, 64
        %v1325 = vld [vmem:[%s1324] sm:$0xf]
        %v1326 = vld [vmem:[%s1324 + $0x4] sm:$0xf]
        %v1329 = vunpack.c.l.b16 %v1325
        %v1330 = vunpack.c.l.b16 %v1326
        %v1331 = vpack.c.b16 %v1330, %v1329
        %1332 = vrot.lane.b32.xlu0 %v730, 109
        %v1333 = vpop.permute.xlu0 %1332
        %1334 = vrot.lane.b32.xlu0 %v731, 109
        %v1335 = vpop.permute.xlu0 %1334
        %1336 = vrot.lane.b32.xlu0 %v722, 109
        %v1337 = vpop.permute.xlu0 %1336
        %vm1338 = vcmask 891904
        %v1339 = vsel %vm1338, %v1333, %v1335
        %v1340 = vsel %vm1338, %v1335, %v1337
        %v1342 = vsel %vm764, %v1331, 0
        %v1345 = vsel %vm768, %v1339, 0
        %v1348 = vsel %vm768, %v1340, 0
        %1350 = vmatprep.subr.bf16.mxu0 0
        %1351 = vmatpush1.bf16.msra.mxu0 0
        %1352 = vmatprep.subr.bf16.mxu0 0
        %1353 = vmatpush1.bf16.msra.mxu0 0
        %1354 = vmatprep.subr.bf16.mxu0 0
        %1355 = vmatpush1.bf16.msra.mxu0 0
        %1356 = vmatprep.subr.bf16.mxu0 0
        %1357 = vmatpush1.bf16.msra.mxu0 0
        %1358 = vmatprep.subr.bf16.mxu0 0
        %1359 = vmatpush1.bf16.msra.mxu0 0
        %1360 = vmatprep.subr.bf16.mxu0 0
        %1361 = vmatpush1.bf16.msra.mxu0 0
        %1362 = vmatprep.subr.bf16.mxu0 0
        %1363 = vmatpush1.bf16.msra.mxu0 0
        %1364 = vmatprep.subr.bf16.mxu0 %v1348
        %1365 = vmatpush1.bf16.msra.mxu0 %v1345
        %1366 = vmatprep.subr.bf16.mxu0 0
        %1367 = vmatpush2.bf16.msra.mxu0 0
        %1368 = vmatprep.subr.bf16.mxu0 0
        %1369 = vmatpush2.bf16.msra.mxu0 0
        %1370 = vmatprep.subr.bf16.mxu0 0
        %1371 = vmatpush2.bf16.msra.mxu0 0
        %1372 = vmatprep.subr.bf16.mxu0 0
        %1373 = vmatpush2.bf16.msra.mxu0 0
        %1374 = vmatprep.subr.bf16.mxu0 0
        %1375 = vmatpush2.bf16.msra.mxu0 0
        %1376 = vmatprep.subr.bf16.mxu0 0
        %1377 = vmatpush2.bf16.msra.mxu0 0
        %1378 = vmatprep.subr.bf16.mxu0 0
        %1379 = vmatpush2.bf16.msra.mxu0 0
        %1380 = vmatprep.subr.bf16.mxu0 0
        %1381 = vmatpush2.bf16.msra.mxu0 0
        %1382 = vmatprep.mubr.bf16.mxu0 0
        %1383 = vmatmul.mubr.bf16.gmra.mxu0 %v1342
        %v1384 = vpop.f32.mrf.mxu0
        %v1385 = vadd.f32 0.0, %v1384
        %v1386 = vpop.f32.mrf.mxu0
        %v1387 = vadd.f32 0.0, %v1386
        %v1388 = vpop.f32.mrf.mxu0
        %v1389 = vadd.f32 0.0, %v1388
        %v1390 = vpop.f32.mrf.mxu0
        %v1391 = vadd.f32 0.0, %v1390
        %1392 = vdwg.mxu0
        %v1393 = vadd.f32 %v1320, %v1385
        %v1394 = vadd.f32 %v1321, %v1387
        %v1395 = vadd.f32 %v1322, %v1389
        %v1396 = vadd.f32 %v1323, %v1391
        %v1397 = vsub.f32 0.0, %v1395
        %v1398 = vsub.f32 0.0, %v1396
        %v1399 = vmul.f32 %v1397, 1.442695
        %v1400 = vpow.pop %v1399
        %v1401 = vmul.f32 %v1398, 1.442695
        %v1402 = vpow.pop %v1401
        %v1403 = vadd.f32 %v1400, 1.0
        %v1404 = vadd.f32 %v1402, 1.0
        %v1405 = vrcp.pop %v1403
        %v1406 = vmul.f32 1.0, %v1405
        %v1407 = vrcp.pop %v1404
        %v1408 = vmul.f32 1.0, %v1407
        %v1409 = vmul.f32 %v1393, %v1406
        %v1410 = vmul.f32 %v1394, %v1408
        %1411 = vst [vmem:[%s718] sm:$0xff] %v1409
        %1412 = vst [vmem:[%s718 + $0x8] sm:$0xff] %v1410
        %s1413 = smul.u32 2, %s20
        %p1414 = scmp.lt.s32.totalorder %s19, 1
        %s1415 = scalar_select %p1414, %s19, 1
        %p1416 = scmp.lt.s32.totalorder %s1413, 1
        %s1417 = scalar_select %p1416, %s1413, 1
        %s1418 = smul.addr %s1415, 2
        %s1419 = sadd.s32 %s1417, %s1418
        %s1420 = smul.addr %s1419, 8
        %s1421 = scalar_lea.vmem %s4, %s1420
        // Predicated region
        $region137: #{glu_conv2d.1} parent=127 // pred_check
          %p1422 = pneg %p149
        $region138: #{glu_conv2d.1} parent=127 // pred_check_branch
          %1424 = sbr.rel (%p1422) target = $region140
        $region139: #{glu_conv2d.1} parent=127 // pred_region
          %s1425 = smul.u32 2, %s20
        $region140: #{glu_conv2d.1} parent=127 // pred_fallthru
          _
      $region128: #{glu_conv2d.1} parent=5 // pred_fallthru
        _
      %p1426 = scmp.le.s32.totalorder 2, %s10
      // Predicated region
      $region141: #{glu_conv2d.1} parent=5 // pred_check
        %p1427 = pneg %p1426
      $region142: #{glu_conv2d.1} parent=5 // pred_check_branch
        %1429 = sbr.rel (%p1427) target = $region144
      $region143: #{glu_conv2d.1} parent=5 // pred_region
        %s1430 = ssub.s32 %s10, 2
        // Predicated region
        $region145: #{glu_conv2d.1} parent=143 // pred_check
          %p1431 = pneg %p155
        $region146: #{glu_conv2d.1} parent=143 // pred_check_branch
          %1433 = sbr.rel (%p1431) target = $region148
        $region147: #{glu_conv2d.1} parent=143 // pred_region
          %s1434 = smul.u32 2, %s22
          %p1435 = scmp.lt.s32.totalorder %s21, 1
          %s1436 = scalar_select %p1435, %s21, 1
          %p1437 = scmp.lt.s32.totalorder %s1434, 1
          %s1438 = scalar_select %p1437, %s1434, 1
          %s1439 = smul.addr %s1436, 2
          %s1440 = sadd.s32 %s1438, %s1439
          %s1441 = smul.addr %s1440, 8
          %s1442 = scalar_lea.vmem %s4, %s1441
        $region148: #{glu_conv2d.1} parent=143 // pred_fallthru
          _
      $region144: #{glu_conv2d.1} parent=5 // pred_fallthru
        _
    $region6: #{glu_conv2d.1} parent=1 // loop_footer
      %s14 = sadd.s32 1, %s10
    $region7: #{glu_conv2d.1} parent=1 // loop_footer_branch
      %9 = sbr.rel target = $region3
    $region8: #{glu_conv2d.1} parent=1 // loop_exit
      _

</llo_original>
